<compile_context>
chip_gen: v6e
topology: v6e:2x2x1
jax: 0.10.0
libtpu: 0.0.40
codegen_flags: <defaults>
</compile_context>

<pallas_src>
import functools

import jax
import jax.numpy as jnp
from jax.experimental import pallas as pl
from jax.experimental.pallas import tpu as pltpu


def _sigmoid(v):
    # EUP tanh formulation of the logistic: keeps the divide off the VALU slot.
    return 0.5 * jnp.tanh(0.5 * v) + 0.5


def _silu(v):
    return v * _sigmoid(v)


def inverted_residual_kernel(
    x_ref,      # (Cin, L)      input slab (L = Nb*HW), io dtype
    w1t_ref,    # (Ce, Cin)     expand 1x1 conv (BN folded), compute dtype
    b1_ref,     # (Ce, 1)       f32
    wm_ref,     # (9, Ce, L)    pre-masked depthwise tap planes, compute dtype
    bd_ref,     # (Ce, 1)       f32
    wf1_ref,    # (Ce, Csq)     SE fc1, f32
    bf1_ref,    # (1, Csq)      f32
    wf2t_ref,   # (Ce, Csq)     SE fc2 (transposed), f32
    bf2_ref,    # (Ce, 1)       f32
    wpt_ref,    # (Cout, Ce)    project 1x1 conv (BN folded), compute dtype
    bp_ref,     # (Cout, 1)     f32
    o_ref,      # (Cout, L)     output slab, io dtype
    dws_ref,    # (Ce, L)       VMEM scratch for the SE-scaled activations
    *, width, hw, nb, use_res):
    cdt = w1t_ref.dtype
    f32 = jnp.float32
    L = x_ref.shape[1]
    inv_hw = 1.0 / float(hw)

    x = x_ref[...]                                   # (Cin, L)
    x_c = x.astype(cdt)

    # ---- expand: 1x1 conv (+folded BN) + SiLU — one MXU dot for the whole slab ----
    z = jnp.dot(w1t_ref[...], x_c, preferred_element_type=f32) + b1_ref[...]
    xe = _silu(z.astype(cdt))                        # (Ce, L) compute dtype

    # ---- depthwise 3x3, stride 1, pad 1 (+folded BN) + SiLU ----
    # Lane rolls (XLU) of the whole slab; tap weights arrive pre-masked so each
    # tap is a single VPU multiply. Taps accumulate in f32 (bf16-path accuracy);
    # the masks also kill any pixel that a roll pulls across an image seam.
    acc = None
    for t in range(9):
        dy, dx = t // 3 - 1, t % 3 - 1
        d = dy * width + dx
        src = xe if d == 0 else pltpu.roll(xe, shift=(-d) % L, axis=1)
        contrib = src * wm_ref[t]                    # (Ce, L) compute dtype
        acc = contrib.astype(f32) if acc is None else acc + contrib
    dw = _silu((acc + bd_ref[...]).astype(cdt))      # (Ce, L) compute dtype

    # ---- squeeze-and-excitation (per-image; tiny VPU/XLU work) ----
    # Only (Ce,1)/(1,Csq)-sized values stay live per iteration; slices are
    # 256-lane (vreg) aligned, so this static unroll carries no vreg pressure.
    wf1 = wf1_ref[...]
    bf1 = bf1_ref[...]
    wf2t = wf2t_ref[...]
    bf2 = bf2_ref[...]
    for b in range(nb):
        sl = dw[:, b * hw:(b + 1) * hw]                                   # (Ce, HW)
        pooled = jnp.sum(sl.astype(f32), axis=1, keepdims=True) * inv_hw  # (Ce, 1)
        s1 = _silu(jnp.sum(pooled * wf1, axis=0, keepdims=True) + bf1)    # (1, Csq)
        s2 = jnp.sum(wf2t * s1, axis=1, keepdims=True) + bf2              # (Ce, 1)
        dws_ref[:, b * hw:(b + 1) * hw] = sl * _sigmoid(s2).astype(cdt)

    # ---- project: 1x1 conv (+folded BN), Identity activation — one MXU dot ----
    out = jnp.dot(wpt_ref[...], dws_ref[...],
                  preferred_element_type=f32) + bp_ref[...]               # (Cout, L) f32

    # ---- DropPath: identity (eval); residual only when stride==1 & Cin==Cout ----
    if use_res:
        out = out + x.astype(f32)                    # residual added in f32
    o_ref[...] = out.astype(o_ref.dtype)


def _dw_masks(H, W):
    """(9, H*W) validity masks for the 3x3 depthwise taps on the flat pixel axis."""
    h = jnp.arange(H).reshape(H, 1)
    w = jnp.arange(W).reshape(1, W)
    rows = []
    for dy in (-1, 0, 1):
        for dx in (-1, 0, 1):
            valid = (h + dy >= 0) & (h + dy < H) & (w + dx >= 0) & (w + dx < W)
            rows.append(valid.reshape(H * W))
    return jnp.stack(rows, axis=0).astype(jnp.float32)


def inverted_residual(x_nchw, params, *, compute_dtype=jnp.float32,
                      batch_block=None, stride=1):
    """x_nchw: (N, Cin, H, W). Output has the same dtype as the input (bf16 I/O OK)."""
    N, Cin, H, W = x_nchw.shape
    # TODO(synk): stride=2 (no residual, downsampled depthwise) not implemented.
    assert stride == 1, "only the stride=1 configuration is implemented"
    HW = H * W
    Ce = params["w1"].shape[1]
    Cout = params["wp"].shape[1]
    use_res = (stride == 1) and (Cin == Cout)
    io_dtype = x_nchw.dtype

    if batch_block is None:
        # Aim for >= 4 grid steps (so "parallel" can shard across v7x's 2 TCs and
        # pipelining has something to overlap), capped at 16 images/step. Pass
        # batch_block explicitly (e.g. 32-64 on v5e/v6e) for very large batches.
        cap = min(N, 16, max(1, N // 4))
        batch_block = max(d for d in range(1, cap + 1) if N % d == 0)
    Nb = batch_block
    assert N % Nb == 0, "batch_block must divide N"
    L = Nb * HW

    cdt = compute_dtype
    f32 = jnp.float32

    # (N, Cin, H, W) -> (Cin, N*HW): pixels AND batch land on the lane axis so the
    # expand/project dots see the whole batch block as their N dimension. The
    # wrapper transposes are cheap XLA relayouts outside the kernel.
    x_t = jnp.transpose(x_nchw.reshape(N, Cin, HW), (1, 0, 2)).reshape(Cin, N * HW)

    # Pre-masked depthwise tap planes, tiled over the Nb images of one slab:
    # wm[t] = (BN-folded tap weight per channel) x (boundary mask per pixel).
    masks = _dw_masks(H, W)                                  # (9, HW)
    mask_tile = jnp.tile(masks, (1, Nb))                     # (9, L)
    wd9 = params["wd"].reshape(9, Ce)                        # (9, Ce)
    wm = (wd9[:, :, None] * mask_tile[:, None, :]).astype(cdt)   # (9, Ce, L)

    weights = [
        params["w1"].T.astype(cdt),                    # w1t  (Ce, Cin)
        params["b1"].reshape(Ce, 1).astype(f32),       # b1   (Ce, 1)
        wm,                                            # wm   (9, Ce, L)
        params["bd"].reshape(Ce, 1).astype(f32),       # bd   (Ce, 1)
        params["wf1"].astype(f32),                     # wf1  (Ce, Csq)
        params["bf1"].reshape(1, -1).astype(f32),      # bf1  (1, Csq)
        params["wf2"].T.astype(f32),                   # wf2t (Ce, Csq)
        params["bf2"].reshape(Ce, 1).astype(f32),      # bf2  (Ce, 1)
        params["wp"].T.astype(cdt),                    # wpt  (Cout, Ce)
        params["bp"].reshape(Cout, 1).astype(f32),     # bp   (Cout, 1)
    ]

    def full_spec(w):
        nd = w.ndim
        return pl.BlockSpec(w.shape, lambda n, _nd=nd: (0,) * _nd)

    kernel = functools.partial(inverted_residual_kernel,
                               width=W, hw=HW, nb=Nb, use_res=use_res)

    out_t = pl.pallas_call(
        kernel,
        out_shape=jax.ShapeDtypeStruct((Cout, N * HW), io_dtype),
        grid_spec=pltpu.PrefetchScalarGridSpec(
            num_scalar_prefetch=0,
            grid=(N // Nb,),
            in_specs=[pl.BlockSpec((Cin, L), lambda n: (0, n))]
                     + [full_spec(w) for w in weights],
            out_specs=pl.BlockSpec((Cout, L), lambda n: (0, n)),
            scratch_shapes=[pltpu.VMEM((Ce, L), cdt)],
        ),
        # Independent batch blocks -> "parallel" lets v7x's two TensorCores split
        # the grid (grid has >= 2 steps by construction when N >= 2). The VMEM
        # limit is raised so Nb up to ~16-32 (wm planes + slab intermediates)
        # fits above the 16/32 MiB scoped defaults; 40 MiB is still well inside
        # v7x's 64 MiB physical VMEM.
        compiler_params=pltpu.CompilerParams(
            dimension_semantics=("parallel",),
            vmem_limit_bytes=40 * 1024 * 1024),
    )(x_t, *weights)

    return jnp.transpose(out_t.reshape(Cout, N, HW), (1, 0, 2)).reshape(N, Cout, H, W)


# ---------------- parameter construction (deterministic, synthetic) ----------------
def make_params(key, cin, ce, cout, csq, k=3):
    ks = jax.random.split(key, 12)

    def bn_fold(kbn, w, c_out):
        k1, k2, k3, k4 = jax.random.split(kbn, 4)
        gamma = jax.random.uniform(k1, (c_out,), minval=0.5, maxval=1.5)
        beta = jax.random.normal(k2, (c_out,)) * 0.1
        mean = jax.random.normal(k3, (c_out,)) * 0.1
        var = jax.random.uniform(k4, (c_out,), minval=0.5, maxval=1.5)
        scale = gamma / jnp.sqrt(var + 1e-5)          # eval-mode BN folded
        return w * scale, (beta - mean * scale).reshape(1, c_out)

    # expand 1x1 conv (Cin->Ce), bias=False, then BN
    w1 = jax.random.normal(ks[0], (cin, ce)) * 0.1
    w1, b1 = bn_fold(ks[1], w1, ce)
    # depthwise k x k conv (groups=Ce), bias=False, then BN
    wd = jax.random.normal(ks[2], (k, k, ce)) * 0.1
    wd, bd = bn_fold(ks[3], wd, ce)
    # SE: fc1 Conv2d(Ce, Csq, 1) with bias; fc2 Conv2d(Csq, Ce, 1) with bias
    wf1 = jax.random.normal(ks[4], (ce, csq)) * 0.1
    bf1 = (jax.random.normal(ks[5], (csq,)) * 0.1).reshape(1, csq)
    wf2 = jax.random.normal(ks[6], (csq, ce)) * 0.1
    bf2 = (jax.random.normal(ks[7], (ce,)) * 0.1).reshape(1, ce)
    # project 1x1 conv (Ce->Cout), bias=False, then BN, Identity activation
    wp = jax.random.normal(ks[8], (ce, cout)) * 0.1
    wp, bp = bn_fold(ks[9], wp, cout)

    return dict(w1=w1, b1=b1, wd=wd, bd=bd, wf1=wf1, bf1=bf1,
                wf2=wf2, bf2=bf2, wp=wp, bp=bp)


# ---------------- pure-JAX reference (same math, no Pallas, NCHW) ----------------
def reference_forward(x_nchw, params):
    x = x_nchw.astype(jnp.float32)
    N, Cin, H, W = x.shape
    silu = lambda v: v * jax.nn.sigmoid(v)
    xe = silu(jnp.einsum("nchw,ce->nehw", x, params["w1"])
              + params["b1"].reshape(1, -1, 1, 1))
    xp = jnp.pad(xe, ((0, 0), (0, 0), (1, 1), (1, 1)))
    acc = jnp.zeros_like(xe)
    for dy in range(3):
        for dx in range(3):
            acc = acc + xp[:, :, dy:dy + H, dx:dx + W] * params["wd"][dy, dx].reshape(1, -1, 1, 1)
    dw = silu(acc + params["bd"].reshape(1, -1, 1, 1))
    pooled = dw.mean(axis=(2, 3))                                  # (N, Ce)
    s1 = silu(pooled @ params["wf1"] + params["bf1"])
    s2 = s1 @ params["wf2"] + params["bf2"]
    dws = dw * jax.nn.sigmoid(s2)[:, :, None, None]
    out = jnp.einsum("nehw,eo->nohw", dws, params["wp"]) + params["bp"].reshape(1, -1, 1, 1)
    return out + x       # residual (stride==1, Cin==Cout configuration)


if __name__ == "__main__":
    # InvertedResidualConfig equivalent: kernel=3, input_c=16, out_c=16,
    # expanded_ratio=4 (-> expanded_c=64), stride=1, attention='se',
    # ghost_conv=False, gs_conv=False, use_fused=False, width_coefficient=1.0.
    # stride==1 and input_c==out_c -> residual connection active.
    N, Cin, H, W = 2, 16, 16, 16
    Ce, Cout = 64, 16
    Csq = Cin // 4  # squeeze_factor=4

    key = jax.random.PRNGKey(0)
    kx, kp = jax.random.split(key)
    x = jax.random.normal(kx, (N, Cin, H, W), dtype=jnp.float32)
    params = make_params(kp, Cin, Ce, Cout, Csq)

    ref = reference_forward(x, params)

    # f32 compute + f32 I/O: exact default path (v5e's vector units are f32-only).
    out_f32 = jax.block_until_ready(
        inverted_residual(x, params, compute_dtype=jnp.float32))
    assert out_f32.shape == (N, Cout, H, W)
    assert jnp.allclose(out_f32, ref, atol=5e-3, rtol=5e-3), (
        "f32 kernel mismatch vs reference")

    # bf16 compute + bf16 I/O (recommended on v6e/v7x): f32 tap accumulation and
    # f32 residual keep this much tighter than plain end-to-end bf16.
    out_bf16 = inverted_residual(x.astype(jnp.bfloat16), params,
                                 compute_dtype=jnp.bfloat16)
    out_bf16 = jax.block_until_ready(out_bf16).astype(jnp.float32)
    assert jnp.allclose(out_bf16, ref, atol=5e-2, rtol=5e-2), (
        "bf16 kernel mismatch vs reference")

    print("KERNEL_OK")
</pallas_src>

<mosaic_0001>
module attributes {stable_mosaic.version = 11 : i64} {
  func.func @inverted_residual_kernel(%arg0: i32, %arg1: memref<16x256xf32, #tpu.memory_space<vmem>>, %arg2: memref<64x16xf32, #tpu.memory_space<vmem>>, %arg3: memref<64x1xf32, #tpu.memory_space<vmem>>, %arg4: memref<9x64x256xf32, #tpu.memory_space<vmem>>, %arg5: memref<64x1xf32, #tpu.memory_space<vmem>>, %arg6: memref<64x4xf32, #tpu.memory_space<vmem>>, %arg7: memref<1x4xf32, #tpu.memory_space<vmem>>, %arg8: memref<64x4xf32, #tpu.memory_space<vmem>>, %arg9: memref<64x1xf32, #tpu.memory_space<vmem>>, %arg10: memref<16x64xf32, #tpu.memory_space<vmem>>, %arg11: memref<16x1xf32, #tpu.memory_space<vmem>>, %arg12: memref<16x256xf32, #tpu.memory_space<vmem>>, %arg13: memref<64x256xf32, #tpu.memory_space<vmem>>) attributes {dimension_semantics = [#tpu.dimension_semantics<parallel>], iteration_bounds = array<i64: 2>, scalar_prefetch = 0 : i64, scratch_operands = 1 : i64, tpu.core_type = #tpu.core_type<tc>, window_params = [{transform_indices = @transform_0, window_bounds = array<i64: 16, 256>}, {pipeline_mode = #tpu.pipeline_mode<synchronous>, transform_indices = @transform_1, window_bounds = array<i64: 64, 16>}, {pipeline_mode = #tpu.pipeline_mode<synchronous>, transform_indices = @transform_2, window_bounds = array<i64: 64, 1>}, {pipeline_mode = #tpu.pipeline_mode<synchronous>, transform_indices = @transform_3, window_bounds = array<i64: 9, 64, 256>}, {pipeline_mode = #tpu.pipeline_mode<synchronous>, transform_indices = @transform_4, window_bounds = array<i64: 64, 1>}, {pipeline_mode = #tpu.pipeline_mode<synchronous>, transform_indices = @transform_5, window_bounds = array<i64: 64, 4>}, {pipeline_mode = #tpu.pipeline_mode<synchronous>, transform_indices = @transform_6, window_bounds = array<i64: 1, 4>}, {pipeline_mode = #tpu.pipeline_mode<synchronous>, transform_indices = @transform_7, window_bounds = array<i64: 64, 4>}, {pipeline_mode = #tpu.pipeline_mode<synchronous>, transform_indices = @transform_8, window_bounds = array<i64: 64, 1>}, {pipeline_mode = #tpu.pipeline_mode<synchronous>, transform_indices = @transform_9, window_bounds = array<i64: 16, 64>}, {pipeline_mode = #tpu.pipeline_mode<synchronous>, transform_indices = @transform_10, window_bounds = array<i64: 16, 1>}, {transform_indices = @transform_11, window_bounds = array<i64: 16, 256>}]} {
    %c0 = arith.constant 0 : index
    %c0_0 = arith.constant 0 : index
    %0 = vector.load %arg1[%c0, %c0_0] : memref<16x256xf32, #tpu.memory_space<vmem>>, vector<16x256xf32>
    %c0_1 = arith.constant 0 : index
    %c0_2 = arith.constant 0 : index
    %1 = vector.load %arg2[%c0_1, %c0_2] : memref<64x16xf32, #tpu.memory_space<vmem>>, vector<64x16xf32>
    %cst = arith.constant dense<0.000000e+00> : vector<64x256xf32>
    %2 = tpu.matmul %1, %0, %cst {dimension_numbers = #tpu.dot_dimension_numbers<[1], [0], [0], [1], [0, 0, 1, 1], [], []>} : vector<64x16xf32>, vector<16x256xf32>, vector<64x256xf32> -> vector<64x256xf32>
    %c0_3 = arith.constant 0 : index
    %c0_4 = arith.constant 0 : index
    %3 = vector.load %arg3[%c0_3, %c0_4] : memref<64x1xf32, #tpu.memory_space<vmem>>, vector<64x1xf32>
    %4 = vector.broadcast %3 : vector<64x1xf32> to vector<64x256xf32>
    %5 = arith.addf %2, %4 : vector<64x256xf32>
    %cst_5 = arith.constant 5.000000e-01 : f32
    %6 = vector.broadcast %cst_5 : f32 to vector<64x256xf32>
    %7 = arith.mulf %6, %5 : vector<64x256xf32>
    %8 = math.tanh %7 : vector<64x256xf32>
    %cst_6 = arith.constant 5.000000e-01 : f32
    %9 = vector.broadcast %cst_6 : f32 to vector<64x256xf32>
    %10 = arith.mulf %9, %8 : vector<64x256xf32>
    %cst_7 = arith.constant 5.000000e-01 : f32
    %11 = vector.broadcast %cst_7 : f32 to vector<64x256xf32>
    %12 = arith.addf %10, %11 : vector<64x256xf32>
    %13 = arith.mulf %5, %12 : vector<64x256xf32>
    %c17_i32 = arith.constant 17 : i32
    %14 = tpu.dynamic_rotate %13 by %c17_i32 dim 1 : vector<64x256xf32>, i32 -> vector<64x256xf32>
    %c0_8 = arith.constant 0 : index
    %c0_9 = arith.constant 0 : index
    %c0_10 = arith.constant 0 : index
    %15 = vector.load %arg4[%c0_8, %c0_9, %c0_10] : memref<9x64x256xf32, #tpu.memory_space<vmem>>, vector<1x64x256xf32>
    %16 = vector.shape_cast %15 : vector<1x64x256xf32> to vector<64x256xf32>
    %17 = arith.mulf %14, %16 : vector<64x256xf32>
    %c16_i32 = arith.constant 16 : i32
    %18 = tpu.dynamic_rotate %13 by %c16_i32 dim 1 : vector<64x256xf32>, i32 -> vector<64x256xf32>
    %c1 = arith.constant 1 : index
    %c0_11 = arith.constant 0 : index
    %c0_12 = arith.constant 0 : index
    %19 = vector.load %arg4[%c1, %c0_11, %c0_12] : memref<9x64x256xf32, #tpu.memory_space<vmem>>, vector<1x64x256xf32>
    %20 = vector.shape_cast %19 : vector<1x64x256xf32> to vector<64x256xf32>
    %21 = arith.mulf %18, %20 : vector<64x256xf32>
    %22 = arith.addf %17, %21 : vector<64x256xf32>
    %c15_i32 = arith.constant 15 : i32
    %23 = tpu.dynamic_rotate %13 by %c15_i32 dim 1 : vector<64x256xf32>, i32 -> vector<64x256xf32>
    %c2 = arith.constant 2 : index
    %c0_13 = arith.constant 0 : index
    %c0_14 = arith.constant 0 : index
    %24 = vector.load %arg4[%c2, %c0_13, %c0_14] : memref<9x64x256xf32, #tpu.memory_space<vmem>>, vector<1x64x256xf32>
    %25 = vector.shape_cast %24 : vector<1x64x256xf32> to vector<64x256xf32>
    %26 = arith.mulf %23, %25 : vector<64x256xf32>
    %27 = arith.addf %22, %26 : vector<64x256xf32>
    %c1_i32 = arith.constant 1 : i32
    %28 = tpu.dynamic_rotate %13 by %c1_i32 dim 1 : vector<64x256xf32>, i32 -> vector<64x256xf32>
    %c3 = arith.constant 3 : index
    %c0_15 = arith.constant 0 : index
    %c0_16 = arith.constant 0 : index
    %29 = vector.load %arg4[%c3, %c0_15, %c0_16] : memref<9x64x256xf32, #tpu.memory_space<vmem>>, vector<1x64x256xf32>
    %30 = vector.shape_cast %29 : vector<1x64x256xf32> to vector<64x256xf32>
    %31 = arith.mulf %28, %30 : vector<64x256xf32>
    %32 = arith.addf %27, %31 : vector<64x256xf32>
    %c4 = arith.constant 4 : index
    %c0_17 = arith.constant 0 : index
    %c0_18 = arith.constant 0 : index
    %33 = vector.load %arg4[%c4, %c0_17, %c0_18] : memref<9x64x256xf32, #tpu.memory_space<vmem>>, vector<1x64x256xf32>
    %34 = vector.shape_cast %33 : vector<1x64x256xf32> to vector<64x256xf32>
    %35 = arith.mulf %13, %34 : vector<64x256xf32>
    %36 = arith.addf %32, %35 : vector<64x256xf32>
    %c255_i32 = arith.constant 255 : i32
    %37 = tpu.dynamic_rotate %13 by %c255_i32 dim 1 : vector<64x256xf32>, i32 -> vector<64x256xf32>
    %c5 = arith.constant 5 : index
    %c0_19 = arith.constant 0 : index
    %c0_20 = arith.constant 0 : index
    %38 = vector.load %arg4[%c5, %c0_19, %c0_20] : memref<9x64x256xf32, #tpu.memory_space<vmem>>, vector<1x64x256xf32>
    %39 = vector.shape_cast %38 : vector<1x64x256xf32> to vector<64x256xf32>
    %40 = arith.mulf %37, %39 : vector<64x256xf32>
    %41 = arith.addf %36, %40 : vector<64x256xf32>
    %c241_i32 = arith.constant 241 : i32
    %42 = tpu.dynamic_rotate %13 by %c241_i32 dim 1 : vector<64x256xf32>, i32 -> vector<64x256xf32>
    %c6 = arith.constant 6 : index
    %c0_21 = arith.constant 0 : index
    %c0_22 = arith.constant 0 : index
    %43 = vector.load %arg4[%c6, %c0_21, %c0_22] : memref<9x64x256xf32, #tpu.memory_space<vmem>>, vector<1x64x256xf32>
    %44 = vector.shape_cast %43 : vector<1x64x256xf32> to vector<64x256xf32>
    %45 = arith.mulf %42, %44 : vector<64x256xf32>
    %46 = arith.addf %41, %45 : vector<64x256xf32>
    %c240_i32 = arith.constant 240 : i32
    %47 = tpu.dynamic_rotate %13 by %c240_i32 dim 1 : vector<64x256xf32>, i32 -> vector<64x256xf32>
    %c7 = arith.constant 7 : index
    %c0_23 = arith.constant 0 : index
    %c0_24 = arith.constant 0 : index
    %48 = vector.load %arg4[%c7, %c0_23, %c0_24] : memref<9x64x256xf32, #tpu.memory_space<vmem>>, vector<1x64x256xf32>
    %49 = vector.shape_cast %48 : vector<1x64x256xf32> to vector<64x256xf32>
    %50 = arith.mulf %47, %49 : vector<64x256xf32>
    %51 = arith.addf %46, %50 : vector<64x256xf32>
    %c239_i32 = arith.constant 239 : i32
    %52 = tpu.dynamic_rotate %13 by %c239_i32 dim 1 : vector<64x256xf32>, i32 -> vector<64x256xf32>
    %c8 = arith.constant 8 : index
    %c0_25 = arith.constant 0 : index
    %c0_26 = arith.constant 0 : index
    %53 = vector.load %arg4[%c8, %c0_25, %c0_26] : memref<9x64x256xf32, #tpu.memory_space<vmem>>, vector<1x64x256xf32>
    %54 = vector.shape_cast %53 : vector<1x64x256xf32> to vector<64x256xf32>
    %55 = arith.mulf %52, %54 : vector<64x256xf32>
    %56 = arith.addf %51, %55 : vector<64x256xf32>
    %c0_27 = arith.constant 0 : index
    %c0_28 = arith.constant 0 : index
    %57 = vector.load %arg5[%c0_27, %c0_28] : memref<64x1xf32, #tpu.memory_space<vmem>>, vector<64x1xf32>
    %58 = vector.broadcast %57 : vector<64x1xf32> to vector<64x256xf32>
    %59 = arith.addf %56, %58 : vector<64x256xf32>
    %cst_29 = arith.constant 5.000000e-01 : f32
    %60 = vector.broadcast %cst_29 : f32 to vector<64x256xf32>
    %61 = arith.mulf %60, %59 : vector<64x256xf32>
    %62 = math.tanh %61 : vector<64x256xf32>
    %cst_30 = arith.constant 5.000000e-01 : f32
    %63 = vector.broadcast %cst_30 : f32 to vector<64x256xf32>
    %64 = arith.mulf %63, %62 : vector<64x256xf32>
    %cst_31 = arith.constant 5.000000e-01 : f32
    %65 = vector.broadcast %cst_31 : f32 to vector<64x256xf32>
    %66 = arith.addf %64, %65 : vector<64x256xf32>
    %67 = arith.mulf %59, %66 : vector<64x256xf32>
    %c0_32 = arith.constant 0 : index
    %c0_33 = arith.constant 0 : index
    %68 = vector.load %arg6[%c0_32, %c0_33] : memref<64x4xf32, #tpu.memory_space<vmem>>, vector<64x4xf32>
    %c0_34 = arith.constant 0 : index
    %c0_35 = arith.constant 0 : index
    %69 = vector.load %arg7[%c0_34, %c0_35] : memref<1x4xf32, #tpu.memory_space<vmem>>, vector<1x4xf32>
    %c0_36 = arith.constant 0 : index
    %c0_37 = arith.constant 0 : index
    %70 = vector.load %arg8[%c0_36, %c0_37] : memref<64x4xf32, #tpu.memory_space<vmem>>, vector<64x4xf32>
    %c0_38 = arith.constant 0 : index
    %c0_39 = arith.constant 0 : index
    %71 = vector.load %arg9[%c0_38, %c0_39] : memref<64x1xf32, #tpu.memory_space<vmem>>, vector<64x1xf32>
    %cst_40 = arith.constant dense<0.000000e+00> : vector<64xf32>
    %72 = vector.multi_reduction <add>, %67, %cst_40 [1] : vector<64x256xf32> to vector<64xf32>
    %73 = vector.shape_cast %72 : vector<64xf32> to vector<64x1xf32>
    %cst_41 = arith.constant 3.906250e-03 : f32
    %74 = vector.broadcast %cst_41 : f32 to vector<64x1xf32>
    %75 = arith.mulf %73, %74 : vector<64x1xf32>
    %76 = vector.broadcast %75 : vector<64x1xf32> to vector<64x4xf32>
    %77 = arith.mulf %76, %68 : vector<64x4xf32>
    %cst_42 = arith.constant dense<0.000000e+00> : vector<4xf32>
    %78 = vector.multi_reduction <add>, %77, %cst_42 [0] : vector<64x4xf32> to vector<4xf32>
    %79 = vector.shape_cast %78 : vector<4xf32> to vector<1x4xf32>
    %80 = arith.addf %79, %69 : vector<1x4xf32>
    %cst_43 = arith.constant 5.000000e-01 : f32
    %81 = vector.broadcast %cst_43 : f32 to vector<1x4xf32>
    %82 = arith.mulf %81, %80 : vector<1x4xf32>
    %83 = math.tanh %82 : vector<1x4xf32>
    %cst_44 = arith.constant 5.000000e-01 : f32
    %84 = vector.broadcast %cst_44 : f32 to vector<1x4xf32>
    %85 = arith.mulf %84, %83 : vector<1x4xf32>
    %cst_45 = arith.constant 5.000000e-01 : f32
    %86 = vector.broadcast %cst_45 : f32 to vector<1x4xf32>
    %87 = arith.addf %85, %86 : vector<1x4xf32>
    %88 = arith.mulf %80, %87 : vector<1x4xf32>
    %89 = vector.broadcast %88 : vector<1x4xf32> to vector<64x4xf32>
    %90 = arith.mulf %70, %89 : vector<64x4xf32>
    %cst_46 = arith.constant dense<0.000000e+00> : vector<64xf32>
    %91 = vector.multi_reduction <add>, %90, %cst_46 [1] : vector<64x4xf32> to vector<64xf32>
    %92 = vector.shape_cast %91 : vector<64xf32> to vector<64x1xf32>
    %93 = arith.addf %92, %71 : vector<64x1xf32>
    %cst_47 = arith.constant 5.000000e-01 : f32
    %94 = vector.broadcast %cst_47 : f32 to vector<64x1xf32>
    %95 = arith.mulf %94, %93 : vector<64x1xf32>
    %96 = math.tanh %95 : vector<64x1xf32>
    %cst_48 = arith.constant 5.000000e-01 : f32
    %97 = vector.broadcast %cst_48 : f32 to vector<64x1xf32>
    %98 = arith.mulf %97, %96 : vector<64x1xf32>
    %cst_49 = arith.constant 5.000000e-01 : f32
    %99 = vector.broadcast %cst_49 : f32 to vector<64x1xf32>
    %100 = arith.addf %98, %99 : vector<64x1xf32>
    %101 = vector.broadcast %100 : vector<64x1xf32> to vector<64x256xf32>
    %102 = arith.mulf %67, %101 : vector<64x256xf32>
    %c0_50 = arith.constant 0 : index
    %c0_51 = arith.constant 0 : index
    %103 = vector.load %arg13[%c0_50, %c0_51] : memref<64x256xf32, #tpu.memory_space<vmem>>, vector<64x256xf32>
    tpu.vector_store %arg13[%c0_50, %c0_51], %102 {strides = array<i32>} : memref<64x256xf32, #tpu.memory_space<vmem>>, vector<64x256xf32>,
    %c0_52 = arith.constant 0 : index
    %c0_53 = arith.constant 0 : index
    %104 = vector.load %arg10[%c0_52, %c0_53] : memref<16x64xf32, #tpu.memory_space<vmem>>, vector<16x64xf32>
    %c0_54 = arith.constant 0 : index
    %c0_55 = arith.constant 0 : index
    %105 = vector.load %arg13[%c0_54, %c0_55] : memref<64x256xf32, #tpu.memory_space<vmem>>, vector<64x256xf32>
    %cst_56 = arith.constant dense<0.000000e+00> : vector<16x256xf32>
    %106 = tpu.matmul %104, %105, %cst_56 {dimension_numbers = #tpu.dot_dimension_numbers<[1], [0], [0], [1], [0, 0, 1, 1], [], []>} : vector<16x64xf32>, vector<64x256xf32>, vector<16x256xf32> -> vector<16x256xf32>
    %c0_57 = arith.constant 0 : index
    %c0_58 = arith.constant 0 : index
    %107 = vector.load %arg11[%c0_57, %c0_58] : memref<16x1xf32, #tpu.memory_space<vmem>>, vector<16x1xf32>
    %108 = vector.broadcast %107 : vector<16x1xf32> to vector<16x256xf32>
    %109 = arith.addf %106, %108 : vector<16x256xf32>
    %110 = arith.addf %109, %0 : vector<16x256xf32>
    %c0_59 = arith.constant 0 : index
    %c0_60 = arith.constant 0 : index
    %111 = vector.load %arg12[%c0_59, %c0_60] : memref<16x256xf32, #tpu.memory_space<vmem>>, vector<16x256xf32>
    tpu.vector_store %arg12[%c0_59, %c0_60], %110 {strides = array<i32>} : memref<16x256xf32, #tpu.memory_space<vmem>>, vector<16x256xf32>,
    return
  }
  func.func @transform_0(%arg0: i32) -> (i32, i32) {
    %c0_i32 = arith.constant 0 : i32
    %c0_i32_0 = arith.constant 0 : i32
    return %c0_i32, %arg0 : i32, i32
  }
  func.func @transform_1(%arg0: i32) -> (i32, i32) {
    %c0_i32 = arith.constant 0 : i32
    %c0_i32_0 = arith.constant 0 : i32
    %c0_i32_1 = arith.constant 0 : i32
    return %c0_i32, %c0_i32_0 : i32, i32
  }
  func.func @transform_2(%arg0: i32) -> (i32, i32) {
    %c0_i32 = arith.constant 0 : i32
    %c0_i32_0 = arith.constant 0 : i32
    %c0_i32_1 = arith.constant 0 : i32
    return %c0_i32, %c0_i32_0 : i32, i32
  }
  func.func @transform_3(%arg0: i32) -> (i32, i32, i32) {
    %c0_i32 = arith.constant 0 : i32
    %c0_i32_0 = arith.constant 0 : i32
    %c0_i32_1 = arith.constant 0 : i32
    %c0_i32_2 = arith.constant 0 : i32
    return %c0_i32, %c0_i32_0, %c0_i32_1 : i32, i32, i32
  }
  func.func @transform_4(%arg0: i32) -> (i32, i32) {
    %c0_i32 = arith.constant 0 : i32
    %c0_i32_0 = arith.constant 0 : i32
    %c0_i32_1 = arith.constant 0 : i32
    return %c0_i32, %c0_i32_0 : i32, i32
  }
  func.func @transform_5(%arg0: i32) -> (i32, i32) {
    %c0_i32 = arith.constant 0 : i32
    %c0_i32_0 = arith.constant 0 : i32
    %c0_i32_1 = arith.constant 0 : i32
    return %c0_i32, %c0_i32_0 : i32, i32
  }
  func.func @transform_6(%arg0: i32) -> (i32, i32) {
    %c0_i32 = arith.constant 0 : i32
    %c0_i32_0 = arith.constant 0 : i32
    %c0_i32_1 = arith.constant 0 : i32
    return %c0_i32, %c0_i32_0 : i32, i32
  }
  func.func @transform_7(%arg0: i32) -> (i32, i32) {
    %c0_i32 = arith.constant 0 : i32
    %c0_i32_0 = arith.constant 0 : i32
    %c0_i32_1 = arith.constant 0 : i32
    return %c0_i32, %c0_i32_0 : i32, i32
  }
  func.func @transform_8(%arg0: i32) -> (i32, i32) {
    %c0_i32 = arith.constant 0 : i32
    %c0_i32_0 = arith.constant 0 : i32
    %c0_i32_1 = arith.constant 0 : i32
    return %c0_i32, %c0_i32_0 : i32, i32
  }
  func.func @transform_9(%arg0: i32) -> (i32, i32) {
    %c0_i32 = arith.constant 0 : i32
    %c0_i32_0 = arith.constant 0 : i32
    %c0_i32_1 = arith.constant 0 : i32
    return %c0_i32, %c0_i32_0 : i32, i32
  }
  func.func @transform_10(%arg0: i32) -> (i32, i32) {
    %c0_i32 = arith.constant 0 : i32
    %c0_i32_0 = arith.constant 0 : i32
    %c0_i32_1 = arith.constant 0 : i32
    return %c0_i32, %c0_i32_0 : i32, i32
  }
  func.func @transform_11(%arg0: i32) -> (i32, i32) {
    %c0_i32 = arith.constant 0 : i32
    %c0_i32_0 = arith.constant 0 : i32
    return %c0_i32, %arg0 : i32, i32
  }
}

</mosaic_0001>

<llo_original>
// kernel: tpu_custom_call.1
$region0: #{tpu_custom_call.1}
  #allocation0 [shape = 'u32[]', space=smem, size = 0x4, offset = 0x4, fixed_abs, tag = 'smem constant byte address 0x4 - core index']
  #allocation1 [shape = 'u32[144,128]{1,0:T(1,128)}', space=vmem, size = 0x12000, scoped, tag = 'internal scratch']
  #allocation2 [shape = 'f32[64,256]{1,0:T(8,128)}', space=vmem, size = 0x10000, scoped, tag = 'scratch operand']
  %s0 = inlined_call_operand.vmem [shape: f32[16,512], index: 0, kind: input, shape index: {}]
  %s1 = inlined_call_operand.vmem [shape: f32[64,16], index: 1, kind: input, shape index: {}]
  %s2 = inlined_call_operand.vmem [shape: f32[64,1], index: 2, kind: input, shape index: {}]
  %s3 = inlined_call_operand.hbm [shape: f32[9,64,256], index: 3, kind: input, shape index: {}]
  %s4 = inlined_call_operand.vmem [shape: f32[64,1], index: 4, kind: input, shape index: {}]
  %s5 = inlined_call_operand.vmem [shape: f32[64,4], index: 5, kind: input, shape index: {}]
  %s6 = inlined_call_operand.vmem [shape: f32[1,4], index: 6, kind: input, shape index: {}]
  %s7 = inlined_call_operand.vmem [shape: f32[64,4], index: 7, kind: input, shape index: {}]
  %s8 = inlined_call_operand.vmem [shape: f32[64,1], index: 8, kind: input, shape index: {}]
  %s9 = inlined_call_operand.vmem [shape: f32[16,64], index: 9, kind: input, shape index: {}]
  %s10 = inlined_call_operand.vmem [shape: f32[16,1], index: 10, kind: input, shape index: {}]
  %s11 = inlined_call_operand.hbm [shape: f32[16,512], index: 11, kind: output, shape index: {}]
  %s12 = sld [smem:[#allocation0]]
  $region104: #{tpu_custom_call.1} parent=0
    _
  %s14 = ssub.s32 1, %s12
  %s15 = scalar_select 0, %s14, %s12
  $region1: #{tpu_custom_call.1} parent=0
    #allocation3 [shape = 'u8[32768]{0}', space=vmem, size = 0x8000, scoped, tag = 'input window, operand 0']
    #allocation4 [shape = 'u8[589824]{0}', space=vmem, size = 0x90000, scoped, tag = 'input window, operand 3, single buffered']
    #allocation5 [shape = 's32[2]{0}', space=sflag, size = 0x8, scoped, tag = 'scoped memory for tpu_custom_call.1']
    #allocation6 [shape = 's32[2]{0}', space=sflag, size = 0x8, scoped, tag = 'scoped memory for tpu_custom_call.1']
    #allocation7 [shape = 'u8[32768]{0}', space=vmem, size = 0x8000, scoped, tag = 'output window, operand 0']
    %16 = vsyncpa [#allocation5], 0
    %17 = vsyncpa [#allocation6], 0
    %s18 = scalar_lea.sflag [#allocation6], 1
    %19 = vsyncpa %s18, 0
    loop: start=0, step=1, limit=4
    $region2: #{tpu_custom_call.1} parent=1 // loop_pre_header
      _
    $region3: #{tpu_custom_call.1} parent=1 // loop_header
      %s21 = sphi 0, %s25
      %p22 = scmp.ge.s32.totalorder %s21, 4
      %s31 = sphi 0, %s33
      %s34 = sphi 0, %s31
      %s35 = sphi 0, %s34
      %s51 = sphi 0, %s35
      %s55 = sphi 0, %s55
      %s57 = sphi 0, %s55
      %s58 = sphi 0, %s57
      %s72 = sphi 0, %s58
      %s76 = sphi 0, %s76
      %s78 = sphi 0, %s76
      %s79 = sphi 0, %s78
      %s93 = sphi 0, %s79
      %s97 = sphi 0, %s97
      %s99 = sphi 0, %s97
      %s100 = sphi 0, %s99
      %s114 = sphi 0, %s100
      %s118 = sphi 0, %s118
      %s120 = sphi 0, %s118
      %s121 = sphi 0, %s120
      %s135 = sphi 0, %s121
      %s139 = sphi 0, %s139
      %s141 = sphi 0, %s139
      %s142 = sphi 0, %s141
      %s156 = sphi 0, %s142
      %s160 = sphi 0, %s160
      %s162 = sphi 0, %s160
      %s163 = sphi 0, %s162
      %s177 = sphi 0, %s163
      %s181 = sphi 0, %s181
      %s183 = sphi 0, %s181
      %s184 = sphi 0, %s183
      %s198 = sphi 0, %s184
      %s202 = sphi 0, %s202
      %s204 = sphi 0, %s202
      %s205 = sphi 0, %s204
      %s219 = sphi 0, %s205
      %s223 = sphi 0, %s223
      %s225 = sphi 0, %s223
      %s226 = sphi 0, %s225
      %s240 = sphi 0, %s226
      %s244 = sphi 0, %s244
      %s246 = sphi 0, %s244
      %s247 = sphi 0, %s246
      %s261 = sphi 0, %s247
      %s267 = sphi 0, %s269
      %s270 = sphi 0, %s267
      %s271 = sphi 0, %s270
      %s287 = sphi 0, %s271
    $region4: #{tpu_custom_call.1} parent=1 // loop_header_branch
      %24 = sbr.rel (%p22) target = $region8
    $region5: #{tpu_custom_call.1} parent=1 // loop_body
      %s26 = ssub.s32 %s21, 1
      %s27 = ssub.s32 %s21, 2
      %s28 = sadd.s32 %s21, 1
      %s29 = ssub.s32 %s21, %s28
      %p30 = scmp.eq.s32.totalorder %s29, 0
      %s32 = sadd.s32 %s31, 1
      %s33 = scalar_select %p30, %s31, %s32
      %p36 = pneg %p30
      %p37 = scmp.eq.s32.totalorder %s21, 1
      %p38 = por %p36, %p37
      %p39 = scmp.ne.s32.totalorder %s31, %s34
      %p40 = scmp.eq.s32.totalorder %s21, 0
      %p41 = por %p39, %p40
      %p42 = scmp.ne.s32.totalorder %s31, %s34
      %p43 = scmp.eq.s32.totalorder %s26, 1
      %p44 = por %p42, %p43
      %p45 = scmp.ne.s32.totalorder %s34, %s35
      %p46 = scmp.eq.s32.totalorder %s26, 0
      %p47 = por %p45, %p46
      %p48 = scmp.ne.s32.totalorder %s34, %s35
      %p49 = scmp.eq.s32.totalorder %s27, 1
      %p50 = por %p48, %p49
      %p52 = scmp.ne.s32.totalorder %s35, %s51
      %p53 = scmp.eq.s32.totalorder %s27, 0
      %p54 = por %p52, %p53
      %s56 = sadd.s32 %s55, 1
      %p59 = scmp.eq.s32.totalorder %s21, 1
      %p60 = scmp.ne.s32.totalorder %s55, %s57
      %p61 = scmp.eq.s32.totalorder %s21, 0
      %p62 = por %p60, %p61
      %p63 = scmp.ne.s32.totalorder %s55, %s57
      %p64 = scmp.eq.s32.totalorder %s26, 1
      %p65 = por %p63, %p64
      %p66 = scmp.ne.s32.totalorder %s57, %s58
      %p67 = scmp.eq.s32.totalorder %s26, 0
      %p68 = por %p66, %p67
      %p69 = scmp.ne.s32.totalorder %s57, %s58
      %p70 = scmp.eq.s32.totalorder %s27, 1
      %p71 = por %p69, %p70
      %p73 = scmp.ne.s32.totalorder %s58, %s72
      %p74 = scmp.eq.s32.totalorder %s27, 0
      %p75 = por %p73, %p74
      %s77 = sadd.s32 %s76, 1
      %p80 = scmp.eq.s32.totalorder %s21, 1
      %p81 = scmp.ne.s32.totalorder %s76, %s78
      %p82 = scmp.eq.s32.totalorder %s21, 0
      %p83 = por %p81, %p82
      %p84 = scmp.ne.s32.totalorder %s76, %s78
      %p85 = scmp.eq.s32.totalorder %s26, 1
      %p86 = por %p84, %p85
      %p87 = scmp.ne.s32.totalorder %s78, %s79
      %p88 = scmp.eq.s32.totalorder %s26, 0
      %p89 = por %p87, %p88
      %p90 = scmp.ne.s32.totalorder %s78, %s79
      %p91 = scmp.eq.s32.totalorder %s27, 1
      %p92 = por %p90, %p91
      %p94 = scmp.ne.s32.totalorder %s79, %s93
      %p95 = scmp.eq.s32.totalorder %s27, 0
      %p96 = por %p94, %p95
      %s98 = sadd.s32 %s97, 1
      %p101 = scmp.eq.s32.totalorder %s21, 1
      %p102 = scmp.ne.s32.totalorder %s97, %s99
      %p103 = scmp.eq.s32.totalorder %s21, 0
      %p104 = por %p102, %p103
      %p105 = scmp.ne.s32.totalorder %s97, %s99
      %p106 = scmp.eq.s32.totalorder %s26, 1
      %p107 = por %p105, %p106
      %p108 = scmp.ne.s32.totalorder %s99, %s100
      %p109 = scmp.eq.s32.totalorder %s26, 0
      %p110 = por %p108, %p109
      %p111 = scmp.ne.s32.totalorder %s99, %s100
      %p112 = scmp.eq.s32.totalorder %s27, 1
      %p113 = por %p111, %p112
      %p115 = scmp.ne.s32.totalorder %s100, %s114
      %p116 = scmp.eq.s32.totalorder %s27, 0
      %p117 = por %p115, %p116
      %s119 = sadd.s32 %s118, 1
      %p122 = scmp.eq.s32.totalorder %s21, 1
      %p123 = scmp.ne.s32.totalorder %s118, %s120
      %p124 = scmp.eq.s32.totalorder %s21, 0
      %p125 = por %p123, %p124
      %p126 = scmp.ne.s32.totalorder %s118, %s120
      %p127 = scmp.eq.s32.totalorder %s26, 1
      %p128 = por %p126, %p127
      %p129 = scmp.ne.s32.totalorder %s120, %s121
      %p130 = scmp.eq.s32.totalorder %s26, 0
      %p131 = por %p129, %p130
      %p132 = scmp.ne.s32.totalorder %s120, %s121
      %p133 = scmp.eq.s32.totalorder %s27, 1
      %p134 = por %p132, %p133
      %p136 = scmp.ne.s32.totalorder %s121, %s135
      %p137 = scmp.eq.s32.totalorder %s27, 0
      %p138 = por %p136, %p137
      %s140 = sadd.s32 %s139, 1
      %p143 = scmp.eq.s32.totalorder %s21, 1
      %p144 = scmp.ne.s32.totalorder %s139, %s141
      %p145 = scmp.eq.s32.totalorder %s21, 0
      %p146 = por %p144, %p145
      %p147 = scmp.ne.s32.totalorder %s139, %s141
      %p148 = scmp.eq.s32.totalorder %s26, 1
      %p149 = por %p147, %p148
      %p150 = scmp.ne.s32.totalorder %s141, %s142
      %p151 = scmp.eq.s32.totalorder %s26, 0
      %p152 = por %p150, %p151
      %p153 = scmp.ne.s32.totalorder %s141, %s142
      %p154 = scmp.eq.s32.totalorder %s27, 1
      %p155 = por %p153, %p154
      %p157 = scmp.ne.s32.totalorder %s142, %s156
      %p158 = scmp.eq.s32.totalorder %s27, 0
      %p159 = por %p157, %p158
      %s161 = sadd.s32 %s160, 1
      %p164 = scmp.eq.s32.totalorder %s21, 1
      %p165 = scmp.ne.s32.totalorder %s160, %s162
      %p166 = scmp.eq.s32.totalorder %s21, 0
      %p167 = por %p165, %p166
      %p168 = scmp.ne.s32.totalorder %s160, %s162
      %p169 = scmp.eq.s32.totalorder %s26, 1
      %p170 = por %p168, %p169
      %p171 = scmp.ne.s32.totalorder %s162, %s163
      %p172 = scmp.eq.s32.totalorder %s26, 0
      %p173 = por %p171, %p172
      %p174 = scmp.ne.s32.totalorder %s162, %s163
      %p175 = scmp.eq.s32.totalorder %s27, 1
      %p176 = por %p174, %p175
      %p178 = scmp.ne.s32.totalorder %s163, %s177
      %p179 = scmp.eq.s32.totalorder %s27, 0
      %p180 = por %p178, %p179
      %s182 = sadd.s32 %s181, 1
      %p185 = scmp.eq.s32.totalorder %s21, 1
      %p186 = scmp.ne.s32.totalorder %s181, %s183
      %p187 = scmp.eq.s32.totalorder %s21, 0
      %p188 = por %p186, %p187
      %p189 = scmp.ne.s32.totalorder %s181, %s183
      %p190 = scmp.eq.s32.totalorder %s26, 1
      %p191 = por %p189, %p190
      %p192 = scmp.ne.s32.totalorder %s183, %s184
      %p193 = scmp.eq.s32.totalorder %s26, 0
      %p194 = por %p192, %p193
      %p195 = scmp.ne.s32.totalorder %s183, %s184
      %p196 = scmp.eq.s32.totalorder %s27, 1
      %p197 = por %p195, %p196
      %p199 = scmp.ne.s32.totalorder %s184, %s198
      %p200 = scmp.eq.s32.totalorder %s27, 0
      %p201 = por %p199, %p200
      %s203 = sadd.s32 %s202, 1
      %p206 = scmp.eq.s32.totalorder %s21, 1
      %p207 = scmp.ne.s32.totalorder %s202, %s204
      %p208 = scmp.eq.s32.totalorder %s21, 0
      %p209 = por %p207, %p208
      %p210 = scmp.ne.s32.totalorder %s202, %s204
      %p211 = scmp.eq.s32.totalorder %s26, 1
      %p212 = por %p210, %p211
      %p213 = scmp.ne.s32.totalorder %s204, %s205
      %p214 = scmp.eq.s32.totalorder %s26, 0
      %p215 = por %p213, %p214
      %p216 = scmp.ne.s32.totalorder %s204, %s205
      %p217 = scmp.eq.s32.totalorder %s27, 1
      %p218 = por %p216, %p217
      %p220 = scmp.ne.s32.totalorder %s205, %s219
      %p221 = scmp.eq.s32.totalorder %s27, 0
      %p222 = por %p220, %p221
      %s224 = sadd.s32 %s223, 1
      %p227 = scmp.eq.s32.totalorder %s21, 1
      %p228 = scmp.ne.s32.totalorder %s223, %s225
      %p229 = scmp.eq.s32.totalorder %s21, 0
      %p230 = por %p228, %p229
      %p231 = scmp.ne.s32.totalorder %s223, %s225
      %p232 = scmp.eq.s32.totalorder %s26, 1
      %p233 = por %p231, %p232
      %p234 = scmp.ne.s32.totalorder %s225, %s226
      %p235 = scmp.eq.s32.totalorder %s26, 0
      %p236 = por %p234, %p235
      %p237 = scmp.ne.s32.totalorder %s225, %s226
      %p238 = scmp.eq.s32.totalorder %s27, 1
      %p239 = por %p237, %p238
      %p241 = scmp.ne.s32.totalorder %s226, %s240
      %p242 = scmp.eq.s32.totalorder %s27, 0
      %p243 = por %p241, %p242
      %s245 = sadd.s32 %s244, 1
      %p248 = scmp.eq.s32.totalorder %s21, 1
      %p249 = scmp.ne.s32.totalorder %s244, %s246
      %p250 = scmp.eq.s32.totalorder %s21, 0
      %p251 = por %p249, %p250
      %p252 = scmp.ne.s32.totalorder %s244, %s246
      %p253 = scmp.eq.s32.totalorder %s26, 1
      %p254 = por %p252, %p253
      %p255 = scmp.ne.s32.totalorder %s246, %s247
      %p256 = scmp.eq.s32.totalorder %s26, 0
      %p257 = por %p255, %p256
      %p258 = scmp.ne.s32.totalorder %s246, %s247
      %p259 = scmp.eq.s32.totalorder %s27, 1
      %p260 = por %p258, %p259
      %p262 = scmp.ne.s32.totalorder %s247, %s261
      %p263 = scmp.eq.s32.totalorder %s27, 0
      %p264 = por %p262, %p263
      %s265 = ssub.s32 %s21, %s28
      %p266 = scmp.eq.s32.totalorder %s265, 0
      %s268 = sadd.s32 %s267, 1
      %s269 = scalar_select %p266, %s267, %s268
      %p272 = pneg %p266
      %p273 = scmp.eq.s32.totalorder %s21, 1
      %p274 = por %p272, %p273
      %p275 = scmp.ne.s32.totalorder %s267, %s270
      %p276 = scmp.eq.s32.totalorder %s21, 0
      %p277 = por %p275, %p276
      %p278 = scmp.ne.s32.totalorder %s267, %s270
      %p279 = scmp.eq.s32.totalorder %s26, 1
      %p280 = por %p278, %p279
      %p281 = scmp.ne.s32.totalorder %s270, %s271
      %p282 = scmp.eq.s32.totalorder %s26, 0
      %p283 = por %p281, %p282
      %p284 = scmp.ne.s32.totalorder %s270, %s271
      %p285 = scmp.eq.s32.totalorder %s27, 1
      %p286 = por %p284, %p285
      %p288 = scmp.ne.s32.totalorder %s271, %s287
      %p289 = scmp.eq.s32.totalorder %s27, 0
      %p290 = por %p288, %p289
      %p291 = scmp.le.s32.totalorder 1, %s21
      %p292 = scmp.lt.s32.totalorder %s21, 3
      %p293 = pnand %p291, %p292
      %p294 = pneg %p293
      // Predicated region
      $region9: #{tpu_custom_call.1} parent=5 // pred_check
        _
      $region10: #{tpu_custom_call.1} parent=5 // pred_check_branch
        %296 = sbr.rel (%p293) target = $region12
      $region11: #{tpu_custom_call.1} parent=5 // pred_region
        %s297 = ssub.s32 %s21, 1
        // Predicated region
        $region13: #{tpu_custom_call.1} parent=11 // pred_check
          %p298 = pneg %p68
        $region14: #{tpu_custom_call.1} parent=11 // pred_check_branch
          %300 = sbr.rel (%p298) target = $region16
        $region15: #{tpu_custom_call.1} parent=11 // pred_region
          _
        $region16: #{tpu_custom_call.1} parent=11 // pred_fallthru
          _
        // Predicated region
        $region17: #{tpu_custom_call.1} parent=11 // pred_check
          %p301 = pneg %p89
        $region18: #{tpu_custom_call.1} parent=11 // pred_check_branch
          %303 = sbr.rel (%p301) target = $region20
        $region19: #{tpu_custom_call.1} parent=11 // pred_region
          _
        $region20: #{tpu_custom_call.1} parent=11 // pred_fallthru
          _
        // Predicated region
        $region21: #{tpu_custom_call.1} parent=11 // pred_check
          %p304 = pneg %p110
        $region22: #{tpu_custom_call.1} parent=11 // pred_check_branch
          %306 = sbr.rel (%p304) target = $region24
        $region23: #{tpu_custom_call.1} parent=11 // pred_region
          %s308 = ssub.s32 18432, 18432
          %309 = vsyncadd [#allocation5], %s308
          %s310 = sshll.u32 [#allocation4], 4
          %s311 = int_to_ptr.vmem [resolvable:$true] %s310
          %316 = dma.hbm_to_vmem [thread:$0]  %s3, 18432, %s311, [#allocation5], 256, 256, 16
        $region24: #{tpu_custom_call.1} parent=11 // pred_fallthru
          _
        // Predicated region
        $region25: #{tpu_custom_call.1} parent=11 // pred_check
          %p317 = pneg %p131
        $region26: #{tpu_custom_call.1} parent=11 // pred_check_branch
          %319 = sbr.rel (%p317) target = $region28
        $region27: #{tpu_custom_call.1} parent=11 // pred_region
          _
        $region28: #{tpu_custom_call.1} parent=11 // pred_fallthru
          _
        // Predicated region
        $region29: #{tpu_custom_call.1} parent=11 // pred_check
          %p320 = pneg %p152
        $region30: #{tpu_custom_call.1} parent=11 // pred_check_branch
          %322 = sbr.rel (%p320) target = $region32
        $region31: #{tpu_custom_call.1} parent=11 // pred_region
          _
        $region32: #{tpu_custom_call.1} parent=11 // pred_fallthru
          _
        // Predicated region
        $region33: #{tpu_custom_call.1} parent=11 // pred_check
          %p323 = pneg %p173
        $region34: #{tpu_custom_call.1} parent=11 // pred_check_branch
          %325 = sbr.rel (%p323) target = $region36
        $region35: #{tpu_custom_call.1} parent=11 // pred_region
          _
        $region36: #{tpu_custom_call.1} parent=11 // pred_fallthru
          _
        // Predicated region
        $region37: #{tpu_custom_call.1} parent=11 // pred_check
          %p326 = pneg %p194
        $region38: #{tpu_custom_call.1} parent=11 // pred_check_branch
          %328 = sbr.rel (%p326) target = $region40
        $region39: #{tpu_custom_call.1} parent=11 // pred_region
          _
        $region40: #{tpu_custom_call.1} parent=11 // pred_fallthru
          _
        // Predicated region
        $region41: #{tpu_custom_call.1} parent=11 // pred_check
          %p329 = pneg %p215
        $region42: #{tpu_custom_call.1} parent=11 // pred_check_branch
          %331 = sbr.rel (%p329) target = $region44
        $region43: #{tpu_custom_call.1} parent=11 // pred_region
          _
        $region44: #{tpu_custom_call.1} parent=11 // pred_fallthru
          _
        // Predicated region
        $region45: #{tpu_custom_call.1} parent=11 // pred_check
          %p332 = pneg %p236
        $region46: #{tpu_custom_call.1} parent=11 // pred_check_branch
          %334 = sbr.rel (%p332) target = $region48
        $region47: #{tpu_custom_call.1} parent=11 // pred_region
          _
        $region48: #{tpu_custom_call.1} parent=11 // pred_fallthru
          _
        // Predicated region
        $region49: #{tpu_custom_call.1} parent=11 // pred_check
          %p335 = pneg %p257
        $region50: #{tpu_custom_call.1} parent=11 // pred_check_branch
          %337 = sbr.rel (%p335) target = $region52
        $region51: #{tpu_custom_call.1} parent=11 // pred_region
          _
        $region52: #{tpu_custom_call.1} parent=11 // pred_fallthru
          _
      $region12: #{tpu_custom_call.1} parent=5 // pred_fallthru
        _
      %p338 = scmp.lt.s32.totalorder %s21, 2
      // Predicated region
      $region53: #{tpu_custom_call.1} parent=5 // pred_check
        %p339 = pneg %p338
      $region54: #{tpu_custom_call.1} parent=5 // pred_check_branch
        %341 = sbr.rel (%p339) target = $region56
      $region55: #{tpu_custom_call.1} parent=5 // pred_region
        // Predicated region
        $region57: #{tpu_custom_call.1} parent=55 // pred_check
          %p342 = pneg %p41
        $region58: #{tpu_custom_call.1} parent=55 // pred_check_branch
          %344 = sbr.rel (%p342) target = $region60
        $region59: #{tpu_custom_call.1} parent=55 // pred_region
          %s345 = sand.u32 %s31, 1
          %s346 = sand.u32 %s31, 1
          %s347 = smul.addr %s346, 32
          %s348 = scalar_lea.vmem [#allocation3], %s347
          %s349 = smul.u32 2, %s21
          %s350 = smul.addr %s349, 8
          %s351 = scalar_lea.vmem %s0, %s350
          // Predicated region
          $region61: #{tpu_custom_call.1} parent=59 // pred_check
            _
          $region62: #{tpu_custom_call.1} parent=59 // pred_check_branch
            %353 = sbr.rel (0) target = $region64
          $region63: #{tpu_custom_call.1} parent=59 // pred_region
            // Predicated region
            $region65: #{tpu_custom_call.1} parent=63 // pred_check
              _
            $region66: #{tpu_custom_call.1} parent=63 // pred_check_branch
              %355 = sbr.rel (0) target = $region68
            $region67: #{tpu_custom_call.1} parent=63 // pred_region
              loop: start=0, step=1, limit=1
              $region69: #{tpu_custom_call.1} parent=67 // loop_pre_header
                _
              $region70: #{tpu_custom_call.1} parent=67 // loop_header
                %s357 = sphi 0, %s361
                %p358 = scmp.ge.s32.totalorder %s357, 1
                %s362 = sphi %s351, %s351
                %s363 = sphi %s348, %s348
              $region71: #{tpu_custom_call.1} parent=67 // loop_header_branch
                %360 = sbr.rel (%p358) target = $region75
              $region72: #{tpu_custom_call.1} parent=67 // loop_body
                %v364 = vld [vmem:[%s362] sm:$0xff]
                %365 = vst [vmem:[%s363] sm:$0xff] %v364
                %v366 = vld [vmem:[%s362 + $0x8] sm:$0xff]
                %367 = vst [vmem:[%s363 + $0x8] sm:$0xff] %v366
                %v368 = vld [vmem:[%s362 + $0x20] sm:$0xff]
                %369 = vst [vmem:[%s363 + $0x10] sm:$0xff] %v368
                %v370 = vld [vmem:[%s362 + $0x28] sm:$0xff]
                %371 = vst [vmem:[%s363 + $0x18] sm:$0xff] %v370
              $region73: #{tpu_custom_call.1} parent=67 // loop_footer
                %s361 = sadd.s32 1, %s357
              $region74: #{tpu_custom_call.1} parent=67 // loop_footer_branch
                %356 = sbr.rel target = $region70
              $region75: #{tpu_custom_call.1} parent=67 // loop_exit
                _
            $region68: #{tpu_custom_call.1} parent=63 // pred_fallthru
              _
            // Predicated region
            $region76: #{tpu_custom_call.1} parent=63 // pred_check
              _
            $region77: #{tpu_custom_call.1} parent=63 // pred_check_branch
              %373 = sbr.rel target = $region79
            $region78: #{tpu_custom_call.1} parent=63 // pred_region
              _
            $region79: #{tpu_custom_call.1} parent=63 // pred_fallthru
              _
          $region64: #{tpu_custom_call.1} parent=59 // pred_fallthru
            _
          %374 = vnop
        $region60: #{tpu_custom_call.1} parent=55 // pred_fallthru
          _
      $region56: #{tpu_custom_call.1} parent=5 // pred_fallthru
        _
      %p375 = scmp.le.s32.totalorder 1, %s21
      %p376 = scmp.lt.s32.totalorder %s21, 3
      %p377 = pnand %p375, %p376
      %p378 = pneg %p377
      // Predicated region
      $region80: #{tpu_custom_call.1} parent=5 // pred_check
        _
      $region81: #{tpu_custom_call.1} parent=5 // pred_check_branch
        %380 = sbr.rel (%p377) target = $region83
      $region82: #{tpu_custom_call.1} parent=5 // pred_region
        %s381 = ssub.s32 %s21, 1
        %s382 = sand.u32 %s34, 1
        %s383 = sand.u32 %s34, 1
        %s384 = smul.addr %s383, 32
        %s385 = scalar_lea.vmem [#allocation3], %s384
        // Predicated region
        $region84: #{tpu_custom_call.1} parent=82 // pred_check
          %p386 = pneg %p47
        $region85: #{tpu_custom_call.1} parent=82 // pred_check_branch
          %388 = sbr.rel (%p386) target = $region87
        $region86: #{tpu_custom_call.1} parent=82 // pred_region
          _
        $region87: #{tpu_custom_call.1} parent=82 // pred_fallthru
          _
        // Predicated region
        $region88: #{tpu_custom_call.1} parent=82 // pred_check
          %p389 = pneg %p110
        $region89: #{tpu_custom_call.1} parent=82 // pred_check_branch
          %391 = sbr.rel (%p389) target = $region91
        $region90: #{tpu_custom_call.1} parent=82 // pred_region
          %392 = dma.done [#allocation5], 18432
        $region91: #{tpu_custom_call.1} parent=82 // pred_fallthru
          _
        %s393 = sand.u32 %s34, 1
        %s394 = sand.u32 %s34, 1
        %s395 = smul.addr %s394, 32
        %s396 = scalar_lea.vmem [#allocation3], %s395
        %p397 = pneg %p47
        %p398 = pneg %p44
        %p399 = pneg %p68
        %p400 = pneg %p65
        %p401 = pneg %p89
        %p402 = pneg %p86
        %p403 = pneg %p110
        %p404 = pneg %p107
        %p405 = pneg %p131
        %p406 = pneg %p128
        %p407 = pneg %p152
        %p408 = pneg %p149
        %p409 = pneg %p173
        %p410 = pneg %p170
        %p411 = pneg %p194
        %p412 = pneg %p191
        %p413 = pneg %p215
        %p414 = pneg %p212
        %p415 = pneg %p236
        %p416 = pneg %p233
        %p417 = pneg %p257
        %p418 = pneg %p254
        %p419 = pneg %p283
        %p420 = pneg %p280
        %s421 = sand.u32 %s270, 1
        %s422 = scalar_lea.sflag [#allocation6], %s421
        %s423 = sand.u32 %s270, 1
        %s424 = smul.addr %s423, 32
        %s425 = scalar_lea.vmem [#allocation7], %s424
        %s426 = smul.u32 2, %s26
        %s427 = smul.u32 2, %s26
        %v428 = vld [vmem:[%s385] sm:$0xff]
        %v429 = vld [vmem:[%s385 + $0x8] sm:$0xff]
        %v430 = vld [vmem:[%s385 + $0x10] sm:$0xff]
        %v431 = vld [vmem:[%s385 + $0x18] sm:$0xff]
        %v432 = vld [vmem:[%s1] sm:$0xff]
        %v433 = vld [vmem:[%s1 + $0x8] sm:$0xff]
        %v434 = vld [vmem:[%s1 + $0x10] sm:$0xff]
        %v435 = vld [vmem:[%s1 + $0x18] sm:$0xff]
        %v436 = vld [vmem:[%s1 + $0x20] sm:$0xff]
        %v437 = vld [vmem:[%s1 + $0x28] sm:$0xff]
        %v438 = vld [vmem:[%s1 + $0x30] sm:$0xff]
        %v439 = vld [vmem:[%s1 + $0x38] sm:$0xff]
        %v440 = vld [vmem:[%s2] sm:$0xff]
        %v441 = vld [vmem:[%s2 + $0x8] sm:$0xff]
        %v442 = vld [vmem:[%s2 + $0x10] sm:$0xff]
        %v443 = vld [vmem:[%s2 + $0x18] sm:$0xff]
        %v444 = vld [vmem:[%s2 + $0x20] sm:$0xff]
        %v445 = vld [vmem:[%s2 + $0x28] sm:$0xff]
        %v446 = vld [vmem:[%s2 + $0x30] sm:$0xff]
        %v447 = vld [vmem:[%s2 + $0x38] sm:$0xff]
        %449 = vset.pattern.permute.xlu0 0
        %450 = vperm.xlu0 %449, %v440
        %v451 = vpop.permute.xlu0 %450
        %454 = vset.pattern.permute.xlu0 0
        %455 = vperm.xlu0 %454, %v441
        %v456 = vpop.permute.xlu0 %455
        %459 = vset.pattern.permute.xlu0 0
        %460 = vperm.xlu0 %459, %v442
        %v461 = vpop.permute.xlu0 %460
        %464 = vset.pattern.permute.xlu0 0
        %465 = vperm.xlu0 %464, %v443
        %v466 = vpop.permute.xlu0 %465
        %469 = vset.pattern.permute.xlu0 0
        %470 = vperm.xlu0 %469, %v444
        %v471 = vpop.permute.xlu0 %470
        %474 = vset.pattern.permute.xlu0 0
        %475 = vperm.xlu0 %474, %v445
        %v476 = vpop.permute.xlu0 %475
        %479 = vset.pattern.permute.xlu0 0
        %480 = vperm.xlu0 %479, %v446
        %v481 = vpop.permute.xlu0 %480
        %484 = vset.pattern.permute.xlu0 0
        %485 = vperm.xlu0 %484, %v447
        %v486 = vpop.permute.xlu0 %485
        %vm488 = vcmask 130048
        %v490 = vsel %vm488, %v432, 0
        %v493 = vsel %vm488, %v433, 0
        %v496 = vsel %vm488, %v434, 0
        %v499 = vsel %vm488, %v435, 0
        %v502 = vsel %vm488, %v436, 0
        %v505 = vsel %vm488, %v437, 0
        %v508 = vsel %vm488, %v438, 0
        %v511 = vsel %vm488, %v439, 0
        %513 = vmatprep.subr.mxu0 0.0
        %514 = vmatpush1.msra.mxu0 0.0
        %515 = vmatprep.subr.mxu0 0.0
        %516 = vmatpush1.msra.mxu0 0.0
        %517 = vmatprep.subr.mxu0 0.0
        %518 = vmatpush1.msra.mxu0 0.0
        %519 = vmatprep.subr.mxu0 0.0
        %520 = vmatpush1.msra.mxu0 0.0
        %521 = vmatprep.subr.mxu0 0.0
        %522 = vmatpush1.msra.mxu0 0.0
        %523 = vmatprep.subr.mxu0 0.0
        %524 = vmatpush1.msra.mxu0 0.0
        %525 = vmatprep.subr.mxu0 0.0
        %526 = vmatpush1.msra.mxu0 0.0
        %527 = vmatprep.subr.mxu0 0.0
        %528 = vmatpush1.msra.mxu0 0.0
        %529 = vmatprep.subr.mxu0 0.0
        %530 = vmatpush1.msra.mxu0 0.0
        %531 = vmatprep.subr.mxu0 0.0
        %532 = vmatpush1.msra.mxu0 0.0
        %533 = vmatprep.subr.mxu0 0.0
        %534 = vmatpush1.msra.mxu0 0.0
        %535 = vmatprep.subr.mxu0 0.0
        %536 = vmatpush1.msra.mxu0 0.0
        %537 = vmatprep.subr.mxu0 0.0
        %538 = vmatpush1.msra.mxu0 0.0
        %539 = vmatprep.subr.mxu0 0.0
        %540 = vmatpush1.msra.mxu0 0.0
        %541 = vmatprep.subr.mxu0 %v431
        %542 = vmatpush1.msra.mxu0 %v430
        %543 = vmatprep.subr.mxu0 %v429
        %544 = vmatpush1.msra.mxu0 %v428
        %545 = vmatprep.subr.mxu0 0.0
        %546 = vmatpush2.msra.mxu0 0.0
        %547 = vmatprep.subr.mxu0 0.0
        %548 = vmatpush2.msra.mxu0 0.0
        %549 = vmatprep.subr.mxu0 0.0
        %550 = vmatpush2.msra.mxu0 0.0
        %551 = vmatprep.subr.mxu0 0.0
        %552 = vmatpush2.msra.mxu0 0.0
        %553 = vmatprep.subr.mxu0 0.0
        %554 = vmatpush2.msra.mxu0 0.0
        %555 = vmatprep.subr.mxu0 0.0
        %556 = vmatpush2.msra.mxu0 0.0
        %557 = vmatprep.subr.mxu0 0.0
        %558 = vmatpush2.msra.mxu0 0.0
        %559 = vmatprep.subr.mxu0 0.0
        %560 = vmatpush2.msra.mxu0 0.0
        %561 = vmatprep.subr.mxu0 0.0
        %562 = vmatpush2.msra.mxu0 0.0
        %563 = vmatprep.subr.mxu0 0.0
        %564 = vmatpush2.msra.mxu0 0.0
        %565 = vmatprep.subr.mxu0 0.0
        %566 = vmatpush2.msra.mxu0 0.0
        %567 = vmatprep.subr.mxu0 0.0
        %568 = vmatpush2.msra.mxu0 0.0
        %569 = vmatprep.subr.mxu0 0.0
        %570 = vmatpush2.msra.mxu0 0.0
        %571 = vmatprep.subr.mxu0 0.0
        %572 = vmatpush2.msra.mxu0 0.0
        %573 = vmatprep.subr.mxu0 0.0
        %574 = vmatpush2.msra.mxu0 0.0
        %575 = vmatprep.subr.mxu0 0.0
        %576 = vmatpush2.msra.mxu0 0.0
        %577 = vmatprep.mubr.f32.mxu0 0.0
        %578 = vmatmul.mubr.f32.gmra.mxu0 %v490
        %v579 = vpop.f32.mrf.mxu0
        %v580 = vadd.f32 %v451, %v579
        %v581 = vpop.f32.mrf.mxu0
        %v582 = vadd.f32 %v451, %v581
        %583 = vmatprep.mubr.f32.mxu0 0.0
        %584 = vmatmul.mubr.f32.gmra.mxu0 %v493
        %v585 = vpop.f32.mrf.mxu0
        %v586 = vadd.f32 %v456, %v585
        %v587 = vpop.f32.mrf.mxu0
        %v588 = vadd.f32 %v456, %v587
        %589 = vmatprep.mubr.f32.mxu0 0.0
        %590 = vmatmul.mubr.f32.gmra.mxu0 %v496
        %v591 = vpop.f32.mrf.mxu0
        %v592 = vadd.f32 %v461, %v591
        %v593 = vpop.f32.mrf.mxu0
        %v594 = vadd.f32 %v461, %v593
        %595 = vmatprep.mubr.f32.mxu0 0.0
        %596 = vmatmul.mubr.f32.gmra.mxu0 %v499
        %v597 = vpop.f32.mrf.mxu0
        %v598 = vadd.f32 %v466, %v597
        %v599 = vpop.f32.mrf.mxu0
        %v600 = vadd.f32 %v466, %v599
        %601 = vmatprep.mubr.f32.mxu0 0.0
        %602 = vmatmul.mubr.f32.gmra.mxu0 %v502
        %v603 = vpop.f32.mrf.mxu0
        %v604 = vadd.f32 %v471, %v603
        %v605 = vpop.f32.mrf.mxu0
        %v606 = vadd.f32 %v471, %v605
        %607 = vmatprep.mubr.f32.mxu0 0.0
        %608 = vmatmul.mubr.f32.gmra.mxu0 %v505
        %v609 = vpop.f32.mrf.mxu0
        %v610 = vadd.f32 %v476, %v609
        %v611 = vpop.f32.mrf.mxu0
        %v612 = vadd.f32 %v476, %v611
        %613 = vmatprep.mubr.f32.mxu0 0.0
        %614 = vmatmul.mubr.f32.gmra.mxu0 %v508
        %v615 = vpop.f32.mrf.mxu0
        %v616 = vadd.f32 %v481, %v615
        %v617 = vpop.f32.mrf.mxu0
        %v618 = vadd.f32 %v481, %v617
        %619 = vmatprep.mubr.f32.mxu0 0.0
        %620 = vmatmul.mubr.f32.gmra.mxu0 %v511
        %v621 = vpop.f32.mrf.mxu0
        %v622 = vadd.f32 %v486, %v621
        %v623 = vpop.f32.mrf.mxu0
        %v624 = vadd.f32 %v486, %v623
        %625 = vdwg.mxu0
        %v626 = vmul.f32 %v580, 0.5
        %v627 = vmul.f32 %v582, 0.5
        %v628 = vmul.f32 %v586, 0.5
        %v629 = vmul.f32 %v588, 0.5
        %v630 = vmul.f32 %v592, 0.5
        %v631 = vmul.f32 %v594, 0.5
        %v632 = vmul.f32 %v598, 0.5
        %v633 = vmul.f32 %v600, 0.5
        %v634 = vmul.f32 %v604, 0.5
        %v635 = vmul.f32 %v606, 0.5
        %v636 = vmul.f32 %v610, 0.5
        %v637 = vmul.f32 %v612, 0.5
        %v638 = vmul.f32 %v616, 0.5
        %v639 = vmul.f32 %v618, 0.5
        %v640 = vmul.f32 %v622, 0.5
        %v641 = vmul.f32 %v624, 0.5
        %v642 = vtanh.pop %v626
        %v643 = vtanh.pop %v627
        %v644 = vtanh.pop %v628
        %v645 = vtanh.pop %v629
        %v646 = vtanh.pop %v630
        %v647 = vtanh.pop %v631
        %v648 = vtanh.pop %v632
        %v649 = vtanh.pop %v633
        %v650 = vtanh.pop %v634
        %v651 = vtanh.pop %v635
        %v652 = vtanh.pop %v636
        %v653 = vtanh.pop %v637
        %v654 = vtanh.pop %v638
        %v655 = vtanh.pop %v639
        %v656 = vtanh.pop %v640
        %v657 = vtanh.pop %v641
        %v658 = vmul.f32 %v642, 0.5
        %v659 = vmul.f32 %v643, 0.5
        %v660 = vmul.f32 %v644, 0.5
        %v661 = vmul.f32 %v645, 0.5
        %v662 = vmul.f32 %v646, 0.5
        %v663 = vmul.f32 %v647, 0.5
        %v664 = vmul.f32 %v648, 0.5
        %v665 = vmul.f32 %v649, 0.5
        %v666 = vmul.f32 %v650, 0.5
        %v667 = vmul.f32 %v651, 0.5
        %v668 = vmul.f32 %v652, 0.5
        %v669 = vmul.f32 %v653, 0.5
        %v670 = vmul.f32 %v654, 0.5
        %v671 = vmul.f32 %v655, 0.5
        %v672 = vmul.f32 %v656, 0.5
        %v673 = vmul.f32 %v657, 0.5
        %v674 = vadd.f32 %v658, 0.5
        %v675 = vadd.f32 %v659, 0.5
        %v676 = vadd.f32 %v660, 0.5
        %v677 = vadd.f32 %v661, 0.5
        %v678 = vadd.f32 %v662, 0.5
        %v679 = vadd.f32 %v663, 0.5
        %v680 = vadd.f32 %v664, 0.5
        %v681 = vadd.f32 %v665, 0.5
        %v682 = vadd.f32 %v666, 0.5
        %v683 = vadd.f32 %v667, 0.5
        %v684 = vadd.f32 %v668, 0.5
        %v685 = vadd.f32 %v669, 0.5
        %v686 = vadd.f32 %v670, 0.5
        %v687 = vadd.f32 %v671, 0.5
        %v688 = vadd.f32 %v672, 0.5
        %v689 = vadd.f32 %v673, 0.5
        %v690 = vmul.f32 %v580, %v674
        %v691 = vmul.f32 %v582, %v675
        %v692 = vmul.f32 %v586, %v676
        %v693 = vmul.f32 %v588, %v677
        %v694 = vmul.f32 %v592, %v678
        %v695 = vmul.f32 %v594, %v679
        %v696 = vmul.f32 %v598, %v680
        %v697 = vmul.f32 %v600, %v681
        %v698 = vmul.f32 %v604, %v682
        %v699 = vmul.f32 %v606, %v683
        %v700 = vmul.f32 %v610, %v684
        %v701 = vmul.f32 %v612, %v685
        %v702 = vmul.f32 %v616, %v686
        %v703 = vmul.f32 %v618, %v687
        %v704 = vmul.f32 %v622, %v688
        %v705 = vmul.f32 %v624, %v689
        %706 = vrot.lane.b32.xlu0 %v690, 17
        %v707 = vpop.permute.xlu0 %706
        %708 = vrot.lane.b32.xlu0 %v692, 17
        %v709 = vpop.permute.xlu0 %708
        %710 = vrot.lane.b32.xlu0 %v694, 17
        %v711 = vpop.permute.xlu0 %710
        %712 = vrot.lane.b32.xlu0 %v696, 17
        %v713 = vpop.permute.xlu0 %712
        %714 = vrot.lane.b32.xlu0 %v698, 17
        %v715 = vpop.permute.xlu0 %714
        %716 = vrot.lane.b32.xlu0 %v700, 17
        %v717 = vpop.permute.xlu0 %716
        %718 = vrot.lane.b32.xlu0 %v702, 17
        %v719 = vpop.permute.xlu0 %718
        %720 = vrot.lane.b32.xlu0 %v704, 17
        %v721 = vpop.permute.xlu0 %720
        %722 = vrot.lane.b32.xlu0 %v691, 17
        %v723 = vpop.permute.xlu0 %722
        %724 = vrot.lane.b32.xlu0 %v693, 17
        %v725 = vpop.permute.xlu0 %724
        %726 = vrot.lane.b32.xlu0 %v695, 17
        %v727 = vpop.permute.xlu0 %726
        %728 = vrot.lane.b32.xlu0 %v697, 17
        %v729 = vpop.permute.xlu0 %728
        %730 = vrot.lane.b32.xlu0 %v699, 17
        %v731 = vpop.permute.xlu0 %730
        %732 = vrot.lane.b32.xlu0 %v701, 17
        %v733 = vpop.permute.xlu0 %732
        %734 = vrot.lane.b32.xlu0 %v703, 17
        %v735 = vpop.permute.xlu0 %734
        %736 = vrot.lane.b32.xlu0 %v705, 17
        %v737 = vpop.permute.xlu0 %736
        %v738 = vlaneseq
        %v739 = vand.u32 %v738, 127
        %vm740 = vcmp.lt.s32.totalorder %v739, 17
        %v741 = vsel %vm740, %v707, %v723
        %v742 = vsel %vm740, %v709, %v725
        %v743 = vsel %vm740, %v711, %v727
        %v744 = vsel %vm740, %v713, %v729
        %v745 = vsel %vm740, %v715, %v731
        %v746 = vsel %vm740, %v717, %v733
        %v747 = vsel %vm740, %v719, %v735
        %v748 = vsel %vm740, %v721, %v737
        %v749 = vsel %vm740, %v723, %v707
        %v750 = vsel %vm740, %v725, %v709
        %v751 = vsel %vm740, %v727, %v711
        %v752 = vsel %vm740, %v729, %v713
        %v753 = vsel %vm740, %v731, %v715
        %v754 = vsel %vm740, %v733, %v717
        %v755 = vsel %vm740, %v735, %v719
        %v756 = vsel %vm740, %v737, %v721
        %v757 = vld [vmem:[#allocation4] sm:$0xff]
        %v758 = vld [vmem:[#allocation4 + $0x8] sm:$0xff]
        %v759 = vld [vmem:[#allocation4 + $0x10] sm:$0xff]
        %v760 = vld [vmem:[#allocation4 + $0x18] sm:$0xff]
        %v761 = vld [vmem:[#allocation4 + $0x20] sm:$0xff]
        %v762 = vld [vmem:[#allocation4 + $0x28] sm:$0xff]
        %v763 = vld [vmem:[#allocation4 + $0x30] sm:$0xff]
        %v764 = vld [vmem:[#allocation4 + $0x38] sm:$0xff]
        %v765 = vld [vmem:[#allocation4 + $0x40] sm:$0xff]
        %v766 = vld [vmem:[#allocation4 + $0x48] sm:$0xff]
        %v767 = vld [vmem:[#allocation4 + $0x50] sm:$0xff]
        %v768 = vld [vmem:[#allocation4 + $0x58] sm:$0xff]
        %v769 = vld [vmem:[#allocation4 + $0x60] sm:$0xff]
        %v770 = vld [vmem:[#allocation4 + $0x68] sm:$0xff]
        %v771 = vld [vmem:[#allocation4 + $0x70] sm:$0xff]
        %v772 = vld [vmem:[#allocation4 + $0x78] sm:$0xff]
        %v773 = vmul.f32 %v749, %v757
        %v774 = vmul.f32 %v741, %v758
        %v775 = vmul.f32 %v750, %v759
        %v776 = vmul.f32 %v742, %v760
        %v777 = vmul.f32 %v751, %v761
        %v778 = vmul.f32 %v743, %v762
        %v779 = vmul.f32 %v752, %v763
        %v780 = vmul.f32 %v744, %v764
        %v781 = vmul.f32 %v753, %v765
        %v782 = vmul.f32 %v745, %v766
        %v783 = vmul.f32 %v754, %v767
        %v784 = vmul.f32 %v746, %v768
        %v785 = vmul.f32 %v755, %v769
        %v786 = vmul.f32 %v747, %v770
        %v787 = vmul.f32 %v756, %v771
        %v788 = vmul.f32 %v748, %v772
        %789 = vrot.lane.b32.xlu0 %v690, 16
        %v790 = vpop.permute.xlu0 %789
        %791 = vrot.lane.b32.xlu0 %v692, 16
        %v792 = vpop.permute.xlu0 %791
        %793 = vrot.lane.b32.xlu0 %v694, 16
        %v794 = vpop.permute.xlu0 %793
        %795 = vrot.lane.b32.xlu0 %v696, 16
        %v796 = vpop.permute.xlu0 %795
        %797 = vrot.lane.b32.xlu0 %v698, 16
        %v798 = vpop.permute.xlu0 %797
        %799 = vrot.lane.b32.xlu0 %v700, 16
        %v800 = vpop.permute.xlu0 %799
        %801 = vrot.lane.b32.xlu0 %v702, 16
        %v802 = vpop.permute.xlu0 %801
        %803 = vrot.lane.b32.xlu0 %v704, 16
        %v804 = vpop.permute.xlu0 %803
        %805 = vrot.lane.b32.xlu0 %v691, 16
        %v806 = vpop.permute.xlu0 %805
        %807 = vrot.lane.b32.xlu0 %v693, 16
        %v808 = vpop.permute.xlu0 %807
        %809 = vrot.lane.b32.xlu0 %v695, 16
        %v810 = vpop.permute.xlu0 %809
        %811 = vrot.lane.b32.xlu0 %v697, 16
        %v812 = vpop.permute.xlu0 %811
        %813 = vrot.lane.b32.xlu0 %v699, 16
        %v814 = vpop.permute.xlu0 %813
        %815 = vrot.lane.b32.xlu0 %v701, 16
        %v816 = vpop.permute.xlu0 %815
        %817 = vrot.lane.b32.xlu0 %v703, 16
        %v818 = vpop.permute.xlu0 %817
        %819 = vrot.lane.b32.xlu0 %v705, 16
        %v820 = vpop.permute.xlu0 %819
        %vm821 = vcmp.lt.s32.totalorder %v739, 16
        %v822 = vsel %vm821, %v790, %v806
        %v823 = vsel %vm821, %v792, %v808
        %v824 = vsel %vm821, %v794, %v810
        %v825 = vsel %vm821, %v796, %v812
        %v826 = vsel %vm821, %v798, %v814
        %v827 = vsel %vm821, %v800, %v816
        %v828 = vsel %vm821, %v802, %v818
        %v829 = vsel %vm821, %v804, %v820
        %v830 = vsel %vm821, %v806, %v790
        %v831 = vsel %vm821, %v808, %v792
        %v832 = vsel %vm821, %v810, %v794
        %v833 = vsel %vm821, %v812, %v796
        %v834 = vsel %vm821, %v814, %v798
        %v835 = vsel %vm821, %v816, %v800
        %v836 = vsel %vm821, %v818, %v802
        %v837 = vsel %vm821, %v820, %v804
        %s838 = scalar_lea.vmem [#allocation4], 128
        %v839 = vld [vmem:[%s838] sm:$0xff]
        %v840 = vld [vmem:[%s838 + $0x8] sm:$0xff]
        %v841 = vld [vmem:[%s838 + $0x10] sm:$0xff]
        %v842 = vld [vmem:[%s838 + $0x18] sm:$0xff]
        %v843 = vld [vmem:[%s838 + $0x20] sm:$0xff]
        %v844 = vld [vmem:[%s838 + $0x28] sm:$0xff]
        %v845 = vld [vmem:[%s838 + $0x30] sm:$0xff]
        %v846 = vld [vmem:[%s838 + $0x38] sm:$0xff]
        %v847 = vld [vmem:[%s838 + $0x40] sm:$0xff]
        %v848 = vld [vmem:[%s838 + $0x48] sm:$0xff]
        %v849 = vld [vmem:[%s838 + $0x50] sm:$0xff]
        %v850 = vld [vmem:[%s838 + $0x58] sm:$0xff]
        %v851 = vld [vmem:[%s838 + $0x60] sm:$0xff]
        %v852 = vld [vmem:[%s838 + $0x68] sm:$0xff]
        %v853 = vld [vmem:[%s838 + $0x70] sm:$0xff]
        %v854 = vld [vmem:[%s838 + $0x78] sm:$0xff]
        %v855 = vmul.f32 %v830, %v839
        %v856 = vmul.f32 %v822, %v840
        %v857 = vmul.f32 %v831, %v841
        %v858 = vmul.f32 %v823, %v842
        %v859 = vmul.f32 %v832, %v843
        %v860 = vmul.f32 %v824, %v844
        %v861 = vmul.f32 %v833, %v845
        %v862 = vmul.f32 %v825, %v846
        %v863 = vmul.f32 %v834, %v847
        %v864 = vmul.f32 %v826, %v848
        %v865 = vmul.f32 %v835, %v849
        %v866 = vmul.f32 %v827, %v850
        %v867 = vmul.f32 %v836, %v851
        %v868 = vmul.f32 %v828, %v852
        %v869 = vmul.f32 %v837, %v853
        %v870 = vmul.f32 %v829, %v854
        %v871 = vadd.f32 %v773, %v855
        %v872 = vadd.f32 %v774, %v856
        %v873 = vadd.f32 %v775, %v857
        %v874 = vadd.f32 %v776, %v858
        %v875 = vadd.f32 %v777, %v859
        %v876 = vadd.f32 %v778, %v860
        %v877 = vadd.f32 %v779, %v861
        %v878 = vadd.f32 %v780, %v862
        %v879 = vadd.f32 %v781, %v863
        %v880 = vadd.f32 %v782, %v864
        %v881 = vadd.f32 %v783, %v865
        %v882 = vadd.f32 %v784, %v866
        %v883 = vadd.f32 %v785, %v867
        %v884 = vadd.f32 %v786, %v868
        %v885 = vadd.f32 %v787, %v869
        %v886 = vadd.f32 %v788, %v870
        %887 = vrot.lane.b32.xlu0 %v690, 15
        %v888 = vpop.permute.xlu0 %887
        %889 = vrot.lane.b32.xlu0 %v692, 15
        %v890 = vpop.permute.xlu0 %889
        %891 = vrot.lane.b32.xlu0 %v694, 15
        %v892 = vpop.permute.xlu0 %891
        %893 = vrot.lane.b32.xlu0 %v696, 15
        %v894 = vpop.permute.xlu0 %893
        %895 = vrot.lane.b32.xlu0 %v698, 15
        %v896 = vpop.permute.xlu0 %895
        %897 = vrot.lane.b32.xlu0 %v700, 15
        %v898 = vpop.permute.xlu0 %897
        %899 = vrot.lane.b32.xlu0 %v702, 15
        %v900 = vpop.permute.xlu0 %899
        %901 = vrot.lane.b32.xlu0 %v704, 15
        %v902 = vpop.permute.xlu0 %901
        %903 = vrot.lane.b32.xlu0 %v691, 15
        %v904 = vpop.permute.xlu0 %903
        %905 = vrot.lane.b32.xlu0 %v693, 15
        %v906 = vpop.permute.xlu0 %905
        %907 = vrot.lane.b32.xlu0 %v695, 15
        %v908 = vpop.permute.xlu0 %907
        %909 = vrot.lane.b32.xlu0 %v697, 15
        %v910 = vpop.permute.xlu0 %909
        %911 = vrot.lane.b32.xlu0 %v699, 15
        %v912 = vpop.permute.xlu0 %911
        %913 = vrot.lane.b32.xlu0 %v701, 15
        %v914 = vpop.permute.xlu0 %913
        %915 = vrot.lane.b32.xlu0 %v703, 15
        %v916 = vpop.permute.xlu0 %915
        %917 = vrot.lane.b32.xlu0 %v705, 15
        %v918 = vpop.permute.xlu0 %917
        %vm919 = vcmp.lt.s32.totalorder %v739, 15
        %v920 = vsel %vm919, %v888, %v904
        %v921 = vsel %vm919, %v890, %v906
        %v922 = vsel %vm919, %v892, %v908
        %v923 = vsel %vm919, %v894, %v910
        %v924 = vsel %vm919, %v896, %v912
        %v925 = vsel %vm919, %v898, %v914
        %v926 = vsel %vm919, %v900, %v916
        %v927 = vsel %vm919, %v902, %v918
        %v928 = vsel %vm919, %v904, %v888
        %v929 = vsel %vm919, %v906, %v890
        %v930 = vsel %vm919, %v908, %v892
        %v931 = vsel %vm919, %v910, %v894
        %v932 = vsel %vm919, %v912, %v896
        %v933 = vsel %vm919, %v914, %v898
        %v934 = vsel %vm919, %v916, %v900
        %v935 = vsel %vm919, %v918, %v902
        %s936 = scalar_lea.vmem [#allocation4], 256
        %v937 = vld [vmem:[%s936] sm:$0xff]
        %v938 = vld [vmem:[%s936 + $0x8] sm:$0xff]
        %v939 = vld [vmem:[%s936 + $0x10] sm:$0xff]
        %v940 = vld [vmem:[%s936 + $0x18] sm:$0xff]
        %v941 = vld [vmem:[%s936 + $0x20] sm:$0xff]
        %v942 = vld [vmem:[%s936 + $0x28] sm:$0xff]
        %v943 = vld [vmem:[%s936 + $0x30] sm:$0xff]
        %v944 = vld [vmem:[%s936 + $0x38] sm:$0xff]
        %v945 = vld [vmem:[%s936 + $0x40] sm:$0xff]
        %v946 = vld [vmem:[%s936 + $0x48] sm:$0xff]
        %v947 = vld [vmem:[%s936 + $0x50] sm:$0xff]
        %v948 = vld [vmem:[%s936 + $0x58] sm:$0xff]
        %v949 = vld [vmem:[%s936 + $0x60] sm:$0xff]
        %v950 = vld [vmem:[%s936 + $0x68] sm:$0xff]
        %v951 = vld [vmem:[%s936 + $0x70] sm:$0xff]
        %v952 = vld [vmem:[%s936 + $0x78] sm:$0xff]
        %v953 = vmul.f32 %v928, %v937
        %v954 = vmul.f32 %v920, %v938
        %v955 = vmul.f32 %v929, %v939
        %v956 = vmul.f32 %v921, %v940
        %v957 = vmul.f32 %v930, %v941
        %v958 = vmul.f32 %v922, %v942
        %v959 = vmul.f32 %v931, %v943
        %v960 = vmul.f32 %v923, %v944
        %v961 = vmul.f32 %v932, %v945
        %v962 = vmul.f32 %v924, %v946
        %v963 = vmul.f32 %v933, %v947
        %v964 = vmul.f32 %v925, %v948
        %v965 = vmul.f32 %v934, %v949
        %v966 = vmul.f32 %v926, %v950
        %v967 = vmul.f32 %v935, %v951
        %v968 = vmul.f32 %v927, %v952
        %v969 = vadd.f32 %v871, %v953
        %v970 = vadd.f32 %v872, %v954
        %v971 = vadd.f32 %v873, %v955
        %v972 = vadd.f32 %v874, %v956
        %v973 = vadd.f32 %v875, %v957
        %v974 = vadd.f32 %v876, %v958
        %v975 = vadd.f32 %v877, %v959
        %v976 = vadd.f32 %v878, %v960
        %v977 = vadd.f32 %v879, %v961
        %v978 = vadd.f32 %v880, %v962
        %v979 = vadd.f32 %v881, %v963
        %v980 = vadd.f32 %v882, %v964
        %v981 = vadd.f32 %v883, %v965
        %v982 = vadd.f32 %v884, %v966
        %v983 = vadd.f32 %v885, %v967
        %v984 = vadd.f32 %v886, %v968
        %985 = vrot.lane.b32.xlu0 %v690, 1
        %v986 = vpop.permute.xlu0 %985
        %987 = vrot.lane.b32.xlu0 %v692, 1
        %v988 = vpop.permute.xlu0 %987
        %989 = vrot.lane.b32.xlu0 %v694, 1
        %v990 = vpop.permute.xlu0 %989
        %991 = vrot.lane.b32.xlu0 %v696, 1
        %v992 = vpop.permute.xlu0 %991
        %993 = vrot.lane.b32.xlu0 %v698, 1
        %v994 = vpop.permute.xlu0 %993
        %995 = vrot.lane.b32.xlu0 %v700, 1
        %v996 = vpop.permute.xlu0 %995
        %997 = vrot.lane.b32.xlu0 %v702, 1
        %v998 = vpop.permute.xlu0 %997
        %999 = vrot.lane.b32.xlu0 %v704, 1
        %v1000 = vpop.permute.xlu0 %999
        %1001 = vrot.lane.b32.xlu0 %v691, 1
        %v1002 = vpop.permute.xlu0 %1001
        %1003 = vrot.lane.b32.xlu0 %v693, 1
        %v1004 = vpop.permute.xlu0 %1003
        %1005 = vrot.lane.b32.xlu0 %v695, 1
        %v1006 = vpop.permute.xlu0 %1005
        %1007 = vrot.lane.b32.xlu0 %v697, 1
        %v1008 = vpop.permute.xlu0 %1007
        %1009 = vrot.lane.b32.xlu0 %v699, 1
        %v1010 = vpop.permute.xlu0 %1009
        %1011 = vrot.lane.b32.xlu0 %v701, 1
        %v1012 = vpop.permute.xlu0 %1011
        %1013 = vrot.lane.b32.xlu0 %v703, 1
        %v1014 = vpop.permute.xlu0 %1013
        %1015 = vrot.lane.b32.xlu0 %v705, 1
        %v1016 = vpop.permute.xlu0 %1015
        %vm1017 = vcmp.lt.s32.totalorder %v739, 1
        %v1018 = vsel %vm1017, %v986, %v1002
        %v1019 = vsel %vm1017, %v988, %v1004
        %v1020 = vsel %vm1017, %v990, %v1006
        %v1021 = vsel %vm1017, %v992, %v1008
        %v1022 = vsel %vm1017, %v994, %v1010
        %v1023 = vsel %vm1017, %v996, %v1012
        %v1024 = vsel %vm1017, %v998, %v1014
        %v1025 = vsel %vm1017, %v1000, %v1016
        %v1026 = vsel %vm1017, %v1002, %v986
        %v1027 = vsel %vm1017, %v1004, %v988
        %v1028 = vsel %vm1017, %v1006, %v990
        %v1029 = vsel %vm1017, %v1008, %v992
        %v1030 = vsel %vm1017, %v1010, %v994
        %v1031 = vsel %vm1017, %v1012, %v996
        %v1032 = vsel %vm1017, %v1014, %v998
        %v1033 = vsel %vm1017, %v1016, %v1000
        %s1034 = scalar_lea.vmem [#allocation4], 384
        %v1035 = vld [vmem:[%s1034] sm:$0xff]
        %v1036 = vld [vmem:[%s1034 + $0x8] sm:$0xff]
        %v1037 = vld [vmem:[%s1034 + $0x10] sm:$0xff]
        %v1038 = vld [vmem:[%s1034 + $0x18] sm:$0xff]
        %v1039 = vld [vmem:[%s1034 + $0x20] sm:$0xff]
        %v1040 = vld [vmem:[%s1034 + $0x28] sm:$0xff]
        %v1041 = vld [vmem:[%s1034 + $0x30] sm:$0xff]
        %v1042 = vld [vmem:[%s1034 + $0x38] sm:$0xff]
        %v1043 = vld [vmem:[%s1034 + $0x40] sm:$0xff]
        %v1044 = vld [vmem:[%s1034 + $0x48] sm:$0xff]
        %v1045 = vld [vmem:[%s1034 + $0x50] sm:$0xff]
        %v1046 = vld [vmem:[%s1034 + $0x58] sm:$0xff]
        %v1047 = vld [vmem:[%s1034 + $0x60] sm:$0xff]
        %v1048 = vld [vmem:[%s1034 + $0x68] sm:$0xff]
        %v1049 = vld [vmem:[%s1034 + $0x70] sm:$0xff]
        %v1050 = vld [vmem:[%s1034 + $0x78] sm:$0xff]
        %v1051 = vmul.f32 %v1026, %v1035
        %v1052 = vmul.f32 %v1018, %v1036
        %v1053 = vmul.f32 %v1027, %v1037
        %v1054 = vmul.f32 %v1019, %v1038
        %v1055 = vmul.f32 %v1028, %v1039
        %v1056 = vmul.f32 %v1020, %v1040
        %v1057 = vmul.f32 %v1029, %v1041
        %v1058 = vmul.f32 %v1021, %v1042
        %v1059 = vmul.f32 %v1030, %v1043
        %v1060 = vmul.f32 %v1022, %v1044
        %v1061 = vmul.f32 %v1031, %v1045
        %v1062 = vmul.f32 %v1023, %v1046
        %v1063 = vmul.f32 %v1032, %v1047
        %v1064 = vmul.f32 %v1024, %v1048
        %v1065 = vmul.f32 %v1033, %v1049
        %v1066 = vmul.f32 %v1025, %v1050
        %v1067 = vadd.f32 %v969, %v1051
        %v1068 = vadd.f32 %v970, %v1052
        %v1069 = vadd.f32 %v971, %v1053
        %v1070 = vadd.f32 %v972, %v1054
        %v1071 = vadd.f32 %v973, %v1055
        %v1072 = vadd.f32 %v974, %v1056
        %v1073 = vadd.f32 %v975, %v1057
        %v1074 = vadd.f32 %v976, %v1058
        %v1075 = vadd.f32 %v977, %v1059
        %v1076 = vadd.f32 %v978, %v1060
        %v1077 = vadd.f32 %v979, %v1061
        %v1078 = vadd.f32 %v980, %v1062
        %v1079 = vadd.f32 %v981, %v1063
        %v1080 = vadd.f32 %v982, %v1064
        %v1081 = vadd.f32 %v983, %v1065
        %v1082 = vadd.f32 %v984, %v1066
        %s1083 = scalar_lea.vmem [#allocation4], 512
        %v1084 = vld [vmem:[%s1083] sm:$0xff]
        %v1085 = vld [vmem:[%s1083 + $0x8] sm:$0xff]
        %v1086 = vld [vmem:[%s1083 + $0x10] sm:$0xff]
        %v1087 = vld [vmem:[%s1083 + $0x18] sm:$0xff]
        %v1088 = vld [vmem:[%s1083 + $0x20] sm:$0xff]
        %v1089 = vld [vmem:[%s1083 + $0x28] sm:$0xff]
        %v1090 = vld [vmem:[%s1083 + $0x30] sm:$0xff]
        %v1091 = vld [vmem:[%s1083 + $0x38] sm:$0xff]
        %v1092 = vld [vmem:[%s1083 + $0x40] sm:$0xff]
        %v1093 = vld [vmem:[%s1083 + $0x48] sm:$0xff]
        %v1094 = vld [vmem:[%s1083 + $0x50] sm:$0xff]
        %v1095 = vld [vmem:[%s1083 + $0x58] sm:$0xff]
        %v1096 = vld [vmem:[%s1083 + $0x60] sm:$0xff]
        %v1097 = vld [vmem:[%s1083 + $0x68] sm:$0xff]
        %v1098 = vld [vmem:[%s1083 + $0x70] sm:$0xff]
        %v1099 = vld [vmem:[%s1083 + $0x78] sm:$0xff]
        %v1100 = vmul.f32 %v690, %v1084
        %v1101 = vmul.f32 %v691, %v1085
        %v1102 = vmul.f32 %v692, %v1086
        %v1103 = vmul.f32 %v693, %v1087
        %v1104 = vmul.f32 %v694, %v1088
        %v1105 = vmul.f32 %v695, %v1089
        %v1106 = vmul.f32 %v696, %v1090
        %v1107 = vmul.f32 %v697, %v1091
        %v1108 = vmul.f32 %v698, %v1092
        %v1109 = vmul.f32 %v699, %v1093
        %v1110 = vmul.f32 %v700, %v1094
        %v1111 = vmul.f32 %v701, %v1095
        %v1112 = vmul.f32 %v702, %v1096
        %v1113 = vmul.f32 %v703, %v1097
        %v1114 = vmul.f32 %v704, %v1098
        %v1115 = vmul.f32 %v705, %v1099
        %v1116 = vadd.f32 %v1067, %v1100
        %v1117 = vadd.f32 %v1068, %v1101
        %v1118 = vadd.f32 %v1069, %v1102
        %v1119 = vadd.f32 %v1070, %v1103
        %v1120 = vadd.f32 %v1071, %v1104
        %v1121 = vadd.f32 %v1072, %v1105
        %v1122 = vadd.f32 %v1073, %v1106
        %v1123 = vadd.f32 %v1074, %v1107
        %v1124 = vadd.f32 %v1075, %v1108
        %v1125 = vadd.f32 %v1076, %v1109
        %v1126 = vadd.f32 %v1077, %v1110
        %v1127 = vadd.f32 %v1078, %v1111
        %v1128 = vadd.f32 %v1079, %v1112
        %v1129 = vadd.f32 %v1080, %v1113
        %v1130 = vadd.f32 %v1081, %v1114
        %v1131 = vadd.f32 %v1082, %v1115
        %1132 = vrot.lane.b32.xlu0 %v690, 127
        %v1133 = vpop.permute.xlu0 %1132
        %1134 = vrot.lane.b32.xlu0 %v692, 127
        %v1135 = vpop.permute.xlu0 %1134
        %1136 = vrot.lane.b32.xlu0 %v694, 127
        %v1137 = vpop.permute.xlu0 %1136
        %1138 = vrot.lane.b32.xlu0 %v696, 127
        %v1139 = vpop.permute.xlu0 %1138
        %1140 = vrot.lane.b32.xlu0 %v698, 127
        %v1141 = vpop.permute.xlu0 %1140
        %1142 = vrot.lane.b32.xlu0 %v700, 127
        %v1143 = vpop.permute.xlu0 %1142
        %1144 = vrot.lane.b32.xlu0 %v702, 127
        %v1145 = vpop.permute.xlu0 %1144
        %1146 = vrot.lane.b32.xlu0 %v704, 127
        %v1147 = vpop.permute.xlu0 %1146
        %1148 = vrot.lane.b32.xlu0 %v691, 127
        %v1149 = vpop.permute.xlu0 %1148
        %1150 = vrot.lane.b32.xlu0 %v693, 127
        %v1151 = vpop.permute.xlu0 %1150
        %1152 = vrot.lane.b32.xlu0 %v695, 127
        %v1153 = vpop.permute.xlu0 %1152
        %1154 = vrot.lane.b32.xlu0 %v697, 127
        %v1155 = vpop.permute.xlu0 %1154
        %1156 = vrot.lane.b32.xlu0 %v699, 127
        %v1157 = vpop.permute.xlu0 %1156
        %1158 = vrot.lane.b32.xlu0 %v701, 127
        %v1159 = vpop.permute.xlu0 %1158
        %1160 = vrot.lane.b32.xlu0 %v703, 127
        %v1161 = vpop.permute.xlu0 %1160
        %1162 = vrot.lane.b32.xlu0 %v705, 127
        %v1163 = vpop.permute.xlu0 %1162
        %vm1164 = vcmp.lt.s32.totalorder %v739, 127
        %v1165 = vsel %vm1164, %v1133, %v1149
        %v1166 = vsel %vm1164, %v1135, %v1151
        %v1167 = vsel %vm1164, %v1137, %v1153
        %v1168 = vsel %vm1164, %v1139, %v1155
        %v1169 = vsel %vm1164, %v1141, %v1157
        %v1170 = vsel %vm1164, %v1143, %v1159
        %v1171 = vsel %vm1164, %v1145, %v1161
        %v1172 = vsel %vm1164, %v1147, %v1163
        %v1173 = vsel %vm1164, %v1149, %v1133
        %v1174 = vsel %vm1164, %v1151, %v1135
        %v1175 = vsel %vm1164, %v1153, %v1137
        %v1176 = vsel %vm1164, %v1155, %v1139
        %v1177 = vsel %vm1164, %v1157, %v1141
        %v1178 = vsel %vm1164, %v1159, %v1143
        %v1179 = vsel %vm1164, %v1161, %v1145
        %v1180 = vsel %vm1164, %v1163, %v1147
        %s1181 = scalar_lea.vmem [#allocation4], 640
        %v1182 = vld [vmem:[%s1181] sm:$0xff]
        %v1183 = vld [vmem:[%s1181 + $0x8] sm:$0xff]
        %v1184 = vld [vmem:[%s1181 + $0x10] sm:$0xff]
        %v1185 = vld [vmem:[%s1181 + $0x18] sm:$0xff]
        %v1186 = vld [vmem:[%s1181 + $0x20] sm:$0xff]
        %v1187 = vld [vmem:[%s1181 + $0x28] sm:$0xff]
        %v1188 = vld [vmem:[%s1181 + $0x30] sm:$0xff]
        %v1189 = vld [vmem:[%s1181 + $0x38] sm:$0xff]
        %v1190 = vld [vmem:[%s1181 + $0x40] sm:$0xff]
        %v1191 = vld [vmem:[%s1181 + $0x48] sm:$0xff]
        %v1192 = vld [vmem:[%s1181 + $0x50] sm:$0xff]
        %v1193 = vld [vmem:[%s1181 + $0x58] sm:$0xff]
        %v1194 = vld [vmem:[%s1181 + $0x60] sm:$0xff]
        %v1195 = vld [vmem:[%s1181 + $0x68] sm:$0xff]
        %v1196 = vld [vmem:[%s1181 + $0x70] sm:$0xff]
        %v1197 = vld [vmem:[%s1181 + $0x78] sm:$0xff]
        %v1198 = vmul.f32 %v1165, %v1182
        %v1199 = vmul.f32 %v1173, %v1183
        %v1200 = vmul.f32 %v1166, %v1184
        %v1201 = vmul.f32 %v1174, %v1185
        %v1202 = vmul.f32 %v1167, %v1186
        %v1203 = vmul.f32 %v1175, %v1187
        %v1204 = vmul.f32 %v1168, %v1188
        %v1205 = vmul.f32 %v1176, %v1189
        %v1206 = vmul.f32 %v1169, %v1190
        %v1207 = vmul.f32 %v1177, %v1191
        %v1208 = vmul.f32 %v1170, %v1192
        %v1209 = vmul.f32 %v1178, %v1193
        %v1210 = vmul.f32 %v1171, %v1194
        %v1211 = vmul.f32 %v1179, %v1195
        %v1212 = vmul.f32 %v1172, %v1196
        %v1213 = vmul.f32 %v1180, %v1197
        %v1214 = vadd.f32 %v1116, %v1198
        %v1215 = vadd.f32 %v1117, %v1199
        %v1216 = vadd.f32 %v1118, %v1200
        %v1217 = vadd.f32 %v1119, %v1201
        %v1218 = vadd.f32 %v1120, %v1202
        %v1219 = vadd.f32 %v1121, %v1203
        %v1220 = vadd.f32 %v1122, %v1204
        %v1221 = vadd.f32 %v1123, %v1205
        %v1222 = vadd.f32 %v1124, %v1206
        %v1223 = vadd.f32 %v1125, %v1207
        %v1224 = vadd.f32 %v1126, %v1208
        %v1225 = vadd.f32 %v1127, %v1209
        %v1226 = vadd.f32 %v1128, %v1210
        %v1227 = vadd.f32 %v1129, %v1211
        %v1228 = vadd.f32 %v1130, %v1212
        %v1229 = vadd.f32 %v1131, %v1213
        %1230 = vrot.lane.b32.xlu0 %v690, 113
        %v1231 = vpop.permute.xlu0 %1230
        %1232 = vrot.lane.b32.xlu0 %v692, 113
        %v1233 = vpop.permute.xlu0 %1232
        %1234 = vrot.lane.b32.xlu0 %v694, 113
        %v1235 = vpop.permute.xlu0 %1234
        %1236 = vrot.lane.b32.xlu0 %v696, 113
        %v1237 = vpop.permute.xlu0 %1236
        %1238 = vrot.lane.b32.xlu0 %v698, 113
        %v1239 = vpop.permute.xlu0 %1238
        %1240 = vrot.lane.b32.xlu0 %v700, 113
        %v1241 = vpop.permute.xlu0 %1240
        %1242 = vrot.lane.b32.xlu0 %v702, 113
        %v1243 = vpop.permute.xlu0 %1242
        %1244 = vrot.lane.b32.xlu0 %v704, 113
        %v1245 = vpop.permute.xlu0 %1244
        %1246 = vrot.lane.b32.xlu0 %v691, 113
        %v1247 = vpop.permute.xlu0 %1246
        %1248 = vrot.lane.b32.xlu0 %v693, 113
        %v1249 = vpop.permute.xlu0 %1248
        %1250 = vrot.lane.b32.xlu0 %v695, 113
        %v1251 = vpop.permute.xlu0 %1250
        %1252 = vrot.lane.b32.xlu0 %v697, 113
        %v1253 = vpop.permute.xlu0 %1252
        %1254 = vrot.lane.b32.xlu0 %v699, 113
        %v1255 = vpop.permute.xlu0 %1254
        %1256 = vrot.lane.b32.xlu0 %v701, 113
        %v1257 = vpop.permute.xlu0 %1256
        %1258 = vrot.lane.b32.xlu0 %v703, 113
        %v1259 = vpop.permute.xlu0 %1258
        %1260 = vrot.lane.b32.xlu0 %v705, 113
        %v1261 = vpop.permute.xlu0 %1260
        %vm1262 = vcmp.lt.s32.totalorder %v739, 113
        %v1263 = vsel %vm1262, %v1231, %v1247
        %v1264 = vsel %vm1262, %v1233, %v1249
        %v1265 = vsel %vm1262, %v1235, %v1251
        %v1266 = vsel %vm1262, %v1237, %v1253
        %v1267 = vsel %vm1262, %v1239, %v1255
        %v1268 = vsel %vm1262, %v1241, %v1257
        %v1269 = vsel %vm1262, %v1243, %v1259
        %v1270 = vsel %vm1262, %v1245, %v1261
        %v1271 = vsel %vm1262, %v1247, %v1231
        %v1272 = vsel %vm1262, %v1249, %v1233
        %v1273 = vsel %vm1262, %v1251, %v1235
        %v1274 = vsel %vm1262, %v1253, %v1237
        %v1275 = vsel %vm1262, %v1255, %v1239
        %v1276 = vsel %vm1262, %v1257, %v1241
        %v1277 = vsel %vm1262, %v1259, %v1243
        %v1278 = vsel %vm1262, %v1261, %v1245
        %s1279 = scalar_lea.vmem [#allocation4], 768
        %v1280 = vld [vmem:[%s1279] sm:$0xff]
        %v1281 = vld [vmem:[%s1279 + $0x8] sm:$0xff]
        %v1282 = vld [vmem:[%s1279 + $0x10] sm:$0xff]
        %v1283 = vld [vmem:[%s1279 + $0x18] sm:$0xff]
        %v1284 = vld [vmem:[%s1279 + $0x20] sm:$0xff]
        %v1285 = vld [vmem:[%s1279 + $0x28] sm:$0xff]
        %v1286 = vld [vmem:[%s1279 + $0x30] sm:$0xff]
        %v1287 = vld [vmem:[%s1279 + $0x38] sm:$0xff]
        %v1288 = vld [vmem:[%s1279 + $0x40] sm:$0xff]
        %v1289 = vld [vmem:[%s1279 + $0x48] sm:$0xff]
        %v1290 = vld [vmem:[%s1279 + $0x50] sm:$0xff]
        %v1291 = vld [vmem:[%s1279 + $0x58] sm:$0xff]
        %v1292 = vld [vmem:[%s1279 + $0x60] sm:$0xff]
        %v1293 = vld [vmem:[%s1279 + $0x68] sm:$0xff]
        %v1294 = vld [vmem:[%s1279 + $0x70] sm:$0xff]
        %v1295 = vld [vmem:[%s1279 + $0x78] sm:$0xff]
        %v1296 = vmul.f32 %v1263, %v1280
        %v1297 = vmul.f32 %v1271, %v1281
        %v1298 = vmul.f32 %v1264, %v1282
        %v1299 = vmul.f32 %v1272, %v1283
        %v1300 = vmul.f32 %v1265, %v1284
        %v1301 = vmul.f32 %v1273, %v1285
        %v1302 = vmul.f32 %v1266, %v1286
        %v1303 = vmul.f32 %v1274, %v1287
        %v1304 = vmul.f32 %v1267, %v1288
        %v1305 = vmul.f32 %v1275, %v1289
        %v1306 = vmul.f32 %v1268, %v1290
        %v1307 = vmul.f32 %v1276, %v1291
        %v1308 = vmul.f32 %v1269, %v1292
        %v1309 = vmul.f32 %v1277, %v1293
        %v1310 = vmul.f32 %v1270, %v1294
        %v1311 = vmul.f32 %v1278, %v1295
        %v1312 = vadd.f32 %v1214, %v1296
        %v1313 = vadd.f32 %v1215, %v1297
        %v1314 = vadd.f32 %v1216, %v1298
        %v1315 = vadd.f32 %v1217, %v1299
        %v1316 = vadd.f32 %v1218, %v1300
        %v1317 = vadd.f32 %v1219, %v1301
        %v1318 = vadd.f32 %v1220, %v1302
        %v1319 = vadd.f32 %v1221, %v1303
        %v1320 = vadd.f32 %v1222, %v1304
        %v1321 = vadd.f32 %v1223, %v1305
        %v1322 = vadd.f32 %v1224, %v1306
        %v1323 = vadd.f32 %v1225, %v1307
        %v1324 = vadd.f32 %v1226, %v1308
        %v1325 = vadd.f32 %v1227, %v1309
        %v1326 = vadd.f32 %v1228, %v1310
        %v1327 = vadd.f32 %v1229, %v1311
        %1328 = vrot.lane.b32.xlu0 %v690, 112
        %v1329 = vpop.permute.xlu0 %1328
        %1330 = vrot.lane.b32.xlu0 %v692, 112
        %v1331 = vpop.permute.xlu0 %1330
        %1332 = vrot.lane.b32.xlu0 %v694, 112
        %v1333 = vpop.permute.xlu0 %1332
        %1334 = vrot.lane.b32.xlu0 %v696, 112
        %v1335 = vpop.permute.xlu0 %1334
        %1336 = vrot.lane.b32.xlu0 %v698, 112
        %v1337 = vpop.permute.xlu0 %1336
        %1338 = vrot.lane.b32.xlu0 %v700, 112
        %v1339 = vpop.permute.xlu0 %1338
        %1340 = vrot.lane.b32.xlu0 %v702, 112
        %v1341 = vpop.permute.xlu0 %1340
        %1342 = vrot.lane.b32.xlu0 %v704, 112
        %v1343 = vpop.permute.xlu0 %1342
        %1344 = vrot.lane.b32.xlu0 %v691, 112
        %v1345 = vpop.permute.xlu0 %1344
        %1346 = vrot.lane.b32.xlu0 %v693, 112
        %v1347 = vpop.permute.xlu0 %1346
        %1348 = vrot.lane.b32.xlu0 %v695, 112
        %v1349 = vpop.permute.xlu0 %1348
        %1350 = vrot.lane.b32.xlu0 %v697, 112
        %v1351 = vpop.permute.xlu0 %1350
        %1352 = vrot.lane.b32.xlu0 %v699, 112
        %v1353 = vpop.permute.xlu0 %1352
        %1354 = vrot.lane.b32.xlu0 %v701, 112
        %v1355 = vpop.permute.xlu0 %1354
        %1356 = vrot.lane.b32.xlu0 %v703, 112
        %v1357 = vpop.permute.xlu0 %1356
        %1358 = vrot.lane.b32.xlu0 %v705, 112
        %v1359 = vpop.permute.xlu0 %1358
        %vm1360 = vcmp.lt.s32.totalorder %v739, 112
        %v1361 = vsel %vm1360, %v1329, %v1345
        %v1362 = vsel %vm1360, %v1331, %v1347
        %v1363 = vsel %vm1360, %v1333, %v1349
        %v1364 = vsel %vm1360, %v1335, %v1351
        %v1365 = vsel %vm1360, %v1337, %v1353
        %v1366 = vsel %vm1360, %v1339, %v1355
        %v1367 = vsel %vm1360, %v1341, %v1357
        %v1368 = vsel %vm1360, %v1343, %v1359
        %v1369 = vsel %vm1360, %v1345, %v1329
        %v1370 = vsel %vm1360, %v1347, %v1331
        %v1371 = vsel %vm1360, %v1349, %v1333
        %v1372 = vsel %vm1360, %v1351, %v1335
        %v1373 = vsel %vm1360, %v1353, %v1337
        %v1374 = vsel %vm1360, %v1355, %v1339
        %v1375 = vsel %vm1360, %v1357, %v1341
        %v1376 = vsel %vm1360, %v1359, %v1343
        %s1377 = scalar_lea.vmem [#allocation4], 896
        %v1378 = vld [vmem:[%s1377] sm:$0xff]
        %v1379 = vld [vmem:[%s1377 + $0x8] sm:$0xff]
        %v1380 = vld [vmem:[%s1377 + $0x10] sm:$0xff]
        %v1381 = vld [vmem:[%s1377 + $0x18] sm:$0xff]
        %v1382 = vld [vmem:[%s1377 + $0x20] sm:$0xff]
        %v1383 = vld [vmem:[%s1377 + $0x28] sm:$0xff]
        %v1384 = vld [vmem:[%s1377 + $0x30] sm:$0xff]
        %v1385 = vld [vmem:[%s1377 + $0x38] sm:$0xff]
        %v1386 = vld [vmem:[%s1377 + $0x40] sm:$0xff]
        %v1387 = vld [vmem:[%s1377 + $0x48] sm:$0xff]
        %v1388 = vld [vmem:[%s1377 + $0x50] sm:$0xff]
        %v1389 = vld [vmem:[%s1377 + $0x58] sm:$0xff]
        %v1390 = vld [vmem:[%s1377 + $0x60] sm:$0xff]
        %v1391 = vld [vmem:[%s1377 + $0x68] sm:$0xff]
        %v1392 = vld [vmem:[%s1377 + $0x70] sm:$0xff]
        %v1393 = vld [vmem:[%s1377 + $0x78] sm:$0xff]
        %v1394 = vmul.f32 %v1361, %v1378
        %v1395 = vmul.f32 %v1369, %v1379
        %v1396 = vmul.f32 %v1362, %v1380
        %v1397 = vmul.f32 %v1370, %v1381
        %v1398 = vmul.f32 %v1363, %v1382
        %v1399 = vmul.f32 %v1371, %v1383
        %v1400 = vmul.f32 %v1364, %v1384
        %v1401 = vmul.f32 %v1372, %v1385
        %v1402 = vmul.f32 %v1365, %v1386
        %v1403 = vmul.f32 %v1373, %v1387
        %v1404 = vmul.f32 %v1366, %v1388
        %v1405 = vmul.f32 %v1374, %v1389
        %v1406 = vmul.f32 %v1367, %v1390
        %v1407 = vmul.f32 %v1375, %v1391
        %v1408 = vmul.f32 %v1368, %v1392
        %v1409 = vmul.f32 %v1376, %v1393
        %v1410 = vadd.f32 %v1312, %v1394
        %v1411 = vadd.f32 %v1313, %v1395
        %v1412 = vadd.f32 %v1314, %v1396
        %v1413 = vadd.f32 %v1315, %v1397
        %v1414 = vadd.f32 %v1316, %v1398
        %v1415 = vadd.f32 %v1317, %v1399
        %v1416 = vadd.f32 %v1318, %v1400
        %v1417 = vadd.f32 %v1319, %v1401
        %v1418 = vadd.f32 %v1320, %v1402
        %v1419 = vadd.f32 %v1321, %v1403
        %v1420 = vadd.f32 %v1322, %v1404
        %v1421 = vadd.f32 %v1323, %v1405
        %v1422 = vadd.f32 %v1324, %v1406
        %v1423 = vadd.f32 %v1325, %v1407
        %v1424 = vadd.f32 %v1326, %v1408
        %v1425 = vadd.f32 %v1327, %v1409
        %1426 = vrot.lane.b32.xlu0 %v690, 111
        %v1427 = vpop.permute.xlu0 %1426
        %1428 = vrot.lane.b32.xlu0 %v692, 111
        %v1429 = vpop.permute.xlu0 %1428
        %1430 = vrot.lane.b32.xlu0 %v694, 111
        %v1431 = vpop.permute.xlu0 %1430
        %1432 = vrot.lane.b32.xlu0 %v696, 111
        %v1433 = vpop.permute.xlu0 %1432
        %1434 = vrot.lane.b32.xlu0 %v698, 111
        %v1435 = vpop.permute.xlu0 %1434
        %1436 = vrot.lane.b32.xlu0 %v700, 111
        %v1437 = vpop.permute.xlu0 %1436
        %1438 = vrot.lane.b32.xlu0 %v702, 111
        %v1439 = vpop.permute.xlu0 %1438
        %1440 = vrot.lane.b32.xlu0 %v704, 111
        %v1441 = vpop.permute.xlu0 %1440
        %1442 = vrot.lane.b32.xlu0 %v691, 111
        %v1443 = vpop.permute.xlu0 %1442
        %1444 = vrot.lane.b32.xlu0 %v693, 111
        %v1445 = vpop.permute.xlu0 %1444
        %1446 = vrot.lane.b32.xlu0 %v695, 111
        %v1447 = vpop.permute.xlu0 %1446
        %1448 = vrot.lane.b32.xlu0 %v697, 111
        %v1449 = vpop.permute.xlu0 %1448
        %1450 = vrot.lane.b32.xlu0 %v699, 111
        %v1451 = vpop.permute.xlu0 %1450
        %1452 = vrot.lane.b32.xlu0 %v701, 111
        %v1453 = vpop.permute.xlu0 %1452
        %1454 = vrot.lane.b32.xlu0 %v703, 111
        %v1455 = vpop.permute.xlu0 %1454
        %1456 = vrot.lane.b32.xlu0 %v705, 111
        %v1457 = vpop.permute.xlu0 %1456
        %vm1458 = vcmp.lt.s32.totalorder %v739, 111
        %v1459 = vsel %vm1458, %v1427, %v1443
        %v1460 = vsel %vm1458, %v1429, %v1445
        %v1461 = vsel %vm1458, %v1431, %v1447
        %v1462 = vsel %vm1458, %v1433, %v1449
        %v1463 = vsel %vm1458, %v1435, %v1451
        %v1464 = vsel %vm1458, %v1437, %v1453
        %v1465 = vsel %vm1458, %v1439, %v1455
        %v1466 = vsel %vm1458, %v1441, %v1457
        %v1467 = vsel %vm1458, %v1443, %v1427
        %v1468 = vsel %vm1458, %v1445, %v1429
        %v1469 = vsel %vm1458, %v1447, %v1431
        %v1470 = vsel %vm1458, %v1449, %v1433
        %v1471 = vsel %vm1458, %v1451, %v1435
        %v1472 = vsel %vm1458, %v1453, %v1437
        %v1473 = vsel %vm1458, %v1455, %v1439
        %v1474 = vsel %vm1458, %v1457, %v1441
        %s1475 = scalar_lea.vmem [#allocation4], 1024
        %v1476 = vld [vmem:[%s1475] sm:$0xff]
        %v1477 = vld [vmem:[%s1475 + $0x8] sm:$0xff]
        %v1478 = vld [vmem:[%s1475 + $0x10] sm:$0xff]
        %v1479 = vld [vmem:[%s1475 + $0x18] sm:$0xff]
        %v1480 = vld [vmem:[%s1475 + $0x20] sm:$0xff]
        %v1481 = vld [vmem:[%s1475 + $0x28] sm:$0xff]
        %v1482 = vld [vmem:[%s1475 + $0x30] sm:$0xff]
        %v1483 = vld [vmem:[%s1475 + $0x38] sm:$0xff]
        %v1484 = vld [vmem:[%s1475 + $0x40] sm:$0xff]
        %v1485 = vld [vmem:[%s1475 + $0x48] sm:$0xff]
        %v1486 = vld [vmem:[%s1475 + $0x50] sm:$0xff]
        %v1487 = vld [vmem:[%s1475 + $0x58] sm:$0xff]
        %v1488 = vld [vmem:[%s1475 + $0x60] sm:$0xff]
        %v1489 = vld [vmem:[%s1475 + $0x68] sm:$0xff]
        %v1490 = vld [vmem:[%s1475 + $0x70] sm:$0xff]
        %v1491 = vld [vmem:[%s1475 + $0x78] sm:$0xff]
        %v1492 = vmul.f32 %v1459, %v1476
        %v1493 = vmul.f32 %v1467, %v1477
        %v1494 = vmul.f32 %v1460, %v1478
        %v1495 = vmul.f32 %v1468, %v1479
        %v1496 = vmul.f32 %v1461, %v1480
        %v1497 = vmul.f32 %v1469, %v1481
        %v1498 = vmul.f32 %v1462, %v1482
        %v1499 = vmul.f32 %v1470, %v1483
        %v1500 = vmul.f32 %v1463, %v1484
        %v1501 = vmul.f32 %v1471, %v1485
        %v1502 = vmul.f32 %v1464, %v1486
        %v1503 = vmul.f32 %v1472, %v1487
        %v1504 = vmul.f32 %v1465, %v1488
        %v1505 = vmul.f32 %v1473, %v1489
        %v1506 = vmul.f32 %v1466, %v1490
        %v1507 = vmul.f32 %v1474, %v1491
        %v1508 = vadd.f32 %v1410, %v1492
        %v1509 = vadd.f32 %v1411, %v1493
        %v1510 = vadd.f32 %v1412, %v1494
        %v1511 = vadd.f32 %v1413, %v1495
        %v1512 = vadd.f32 %v1414, %v1496
        %v1513 = vadd.f32 %v1415, %v1497
        %v1514 = vadd.f32 %v1416, %v1498
        %v1515 = vadd.f32 %v1417, %v1499
        %v1516 = vadd.f32 %v1418, %v1500
        %v1517 = vadd.f32 %v1419, %v1501
        %v1518 = vadd.f32 %v1420, %v1502
        %v1519 = vadd.f32 %v1421, %v1503
        %v1520 = vadd.f32 %v1422, %v1504
        %v1521 = vadd.f32 %v1423, %v1505
        %v1522 = vadd.f32 %v1424, %v1506
        %v1523 = vadd.f32 %v1425, %v1507
        %v1524 = vld [vmem:[%s4] sm:$0xff]
        %v1525 = vld [vmem:[%s4 + $0x8] sm:$0xff]
        %v1526 = vld [vmem:[%s4 + $0x10] sm:$0xff]
        %v1527 = vld [vmem:[%s4 + $0x18] sm:$0xff]
        %v1528 = vld [vmem:[%s4 + $0x20] sm:$0xff]
        %v1529 = vld [vmem:[%s4 + $0x28] sm:$0xff]
        %v1530 = vld [vmem:[%s4 + $0x30] sm:$0xff]
        %v1531 = vld [vmem:[%s4 + $0x38] sm:$0xff]
        %1533 = vset.pattern.permute.xlu0 0
        %1534 = vperm.xlu0 %1533, %v1524
        %v1535 = vpop.permute.xlu0 %1534
        %1538 = vset.pattern.permute.xlu0 0
        %1539 = vperm.xlu0 %1538, %v1525
        %v1540 = vpop.permute.xlu0 %1539
        %1543 = vset.pattern.permute.xlu0 0
        %1544 = vperm.xlu0 %1543, %v1526
        %v1545 = vpop.permute.xlu0 %1544
        %1548 = vset.pattern.permute.xlu0 0
        %1549 = vperm.xlu0 %1548, %v1527
        %v1550 = vpop.permute.xlu0 %1549
        %1553 = vset.pattern.permute.xlu0 0
        %1554 = vperm.xlu0 %1553, %v1528
        %v1555 = vpop.permute.xlu0 %1554
        %1558 = vset.pattern.permute.xlu0 0
        %1559 = vperm.xlu0 %1558, %v1529
        %v1560 = vpop.permute.xlu0 %1559
        %1563 = vset.pattern.permute.xlu0 0
        %1564 = vperm.xlu0 %1563, %v1530
        %v1565 = vpop.permute.xlu0 %1564
        %1568 = vset.pattern.permute.xlu0 0
        %1569 = vperm.xlu0 %1568, %v1531
        %v1570 = vpop.permute.xlu0 %1569
        %v1572 = vadd.f32 %v1508, %v1535
        %v1573 = vadd.f32 %v1509, %v1535
        %v1574 = vadd.f32 %v1510, %v1540
        %v1575 = vadd.f32 %v1511, %v1540
        %v1576 = vadd.f32 %v1512, %v1545
        %v1577 = vadd.f32 %v1513, %v1545
        %v1578 = vadd.f32 %v1514, %v1550
        %v1579 = vadd.f32 %v1515, %v1550
        %v1580 = vadd.f32 %v1516, %v1555
        %v1581 = vadd.f32 %v1517, %v1555
        %v1582 = vadd.f32 %v1518, %v1560
        %v1583 = vadd.f32 %v1519, %v1560
        %v1584 = vadd.f32 %v1520, %v1565
        %v1585 = vadd.f32 %v1521, %v1565
        %v1586 = vadd.f32 %v1522, %v1570
        %v1587 = vadd.f32 %v1523, %v1570
        %v1588 = vmul.f32 %v1572, 0.5
        %v1589 = vmul.f32 %v1573, 0.5
        %v1590 = vmul.f32 %v1574, 0.5
        %v1591 = vmul.f32 %v1575, 0.5
        %v1592 = vmul.f32 %v1576, 0.5
        %v1593 = vmul.f32 %v1577, 0.5
        %v1594 = vmul.f32 %v1578, 0.5
        %v1595 = vmul.f32 %v1579, 0.5
        %v1596 = vmul.f32 %v1580, 0.5
        %v1597 = vmul.f32 %v1581, 0.5
        %v1598 = vmul.f32 %v1582, 0.5
        %v1599 = vmul.f32 %v1583, 0.5
        %v1600 = vmul.f32 %v1584, 0.5
        %v1601 = vmul.f32 %v1585, 0.5
        %v1602 = vmul.f32 %v1586, 0.5
        %v1603 = vmul.f32 %v1587, 0.5
        %v1604 = vtanh.pop %v1588
        %v1605 = vtanh.pop %v1589
        %v1606 = vtanh.pop %v1590
        %v1607 = vtanh.pop %v1591
        %v1608 = vtanh.pop %v1592
        %v1609 = vtanh.pop %v1593
        %v1610 = vtanh.pop %v1594
        %v1611 = vtanh.pop %v1595
        %v1612 = vtanh.pop %v1596
        %v1613 = vtanh.pop %v1597
        %v1614 = vtanh.pop %v1598
        %v1615 = vtanh.pop %v1599
        %v1616 = vtanh.pop %v1600
        %v1617 = vtanh.pop %v1601
        %v1618 = vtanh.pop %v1602
        %v1619 = vtanh.pop %v1603
        %v1620 = vmul.f32 %v1604, 0.5
        %v1621 = vmul.f32 %v1605, 0.5
        %v1622 = vmul.f32 %v1606, 0.5
        %v1623 = vmul.f32 %v1607, 0.5
        %v1624 = vmul.f32 %v1608, 0.5
        %v1625 = vmul.f32 %v1609, 0.5
        %v1626 = vmul.f32 %v1610, 0.5
        %v1627 = vmul.f32 %v1611, 0.5
        %v1628 = vmul.f32 %v1612, 0.5
        %v1629 = vmul.f32 %v1613, 0.5
        %v1630 = vmul.f32 %v1614, 0.5
        %v1631 = vmul.f32 %v1615, 0.5
        %v1632 = vmul.f32 %v1616, 0.5
        %v1633 = vmul.f32 %v1617, 0.5
        %v1634 = vmul.f32 %v1618, 0.5
        %v1635 = vmul.f32 %v1619, 0.5
        %v1636 = vadd.f32 %v1620, 0.5
        %v1637 = vadd.f32 %v1621, 0.5
        %v1638 = vadd.f32 %v1622, 0.5
        %v1639 = vadd.f32 %v1623, 0.5
        %v1640 = vadd.f32 %v1624, 0.5
        %v1641 = vadd.f32 %v1625, 0.5
        %v1642 = vadd.f32 %v1626, 0.5
        %v1643 = vadd.f32 %v1627, 0.5
        %v1644 = vadd.f32 %v1628, 0.5
        %v1645 = vadd.f32 %v1629, 0.5
        %v1646 = vadd.f32 %v1630, 0.5
        %v1647 = vadd.f32 %v1631, 0.5
        %v1648 = vadd.f32 %v1632, 0.5
        %v1649 = vadd.f32 %v1633, 0.5
        %v1650 = vadd.f32 %v1634, 0.5
        %v1651 = vadd.f32 %v1635, 0.5
        %v1652 = vmul.f32 %v1572, %v1636
        %v1653 = vmul.f32 %v1573, %v1637
        %v1654 = vmul.f32 %v1574, %v1638
        %v1655 = vmul.f32 %v1575, %v1639
        %v1656 = vmul.f32 %v1576, %v1640
        %v1657 = vmul.f32 %v1577, %v1641
        %v1658 = vmul.f32 %v1578, %v1642
        %v1659 = vmul.f32 %v1579, %v1643
        %v1660 = vmul.f32 %v1580, %v1644
        %v1661 = vmul.f32 %v1581, %v1645
        %v1662 = vmul.f32 %v1582, %v1646
        %v1663 = vmul.f32 %v1583, %v1647
        %v1664 = vmul.f32 %v1584, %v1648
        %v1665 = vmul.f32 %v1585, %v1649
        %v1666 = vmul.f32 %v1586, %v1650
        %v1667 = vmul.f32 %v1587, %v1651
        %v1668 = vld [vmem:[%s5] sm:$0xff]
        %v1669 = vld [vmem:[%s5 + $0x8] sm:$0xff]
        %v1670 = vld [vmem:[%s5 + $0x10] sm:$0xff]
        %v1671 = vld [vmem:[%s5 + $0x18] sm:$0xff]
        %v1672 = vld [vmem:[%s5 + $0x20] sm:$0xff]
        %v1673 = vld [vmem:[%s5 + $0x28] sm:$0xff]
        %v1674 = vld [vmem:[%s5 + $0x30] sm:$0xff]
        %v1675 = vld [vmem:[%s5 + $0x38] sm:$0xff]
        %v1676 = vld [vmem:[%s6] sm:$0x1]
        %v1677 = vld [vmem:[%s7] sm:$0xff]
        %v1678 = vld [vmem:[%s7 + $0x8] sm:$0xff]
        %v1679 = vld [vmem:[%s7 + $0x10] sm:$0xff]
        %v1680 = vld [vmem:[%s7 + $0x18] sm:$0xff]
        %v1681 = vld [vmem:[%s7 + $0x20] sm:$0xff]
        %v1682 = vld [vmem:[%s7 + $0x28] sm:$0xff]
        %v1683 = vld [vmem:[%s7 + $0x30] sm:$0xff]
        %v1684 = vld [vmem:[%s7 + $0x38] sm:$0xff]
        %v1685 = vld [vmem:[%s8] sm:$0xff]
        %v1686 = vld [vmem:[%s8 + $0x8] sm:$0xff]
        %v1687 = vld [vmem:[%s8 + $0x10] sm:$0xff]
        %v1688 = vld [vmem:[%s8 + $0x18] sm:$0xff]
        %v1689 = vld [vmem:[%s8 + $0x20] sm:$0xff]
        %v1690 = vld [vmem:[%s8 + $0x28] sm:$0xff]
        %v1691 = vld [vmem:[%s8 + $0x30] sm:$0xff]
        %v1692 = vld [vmem:[%s8 + $0x38] sm:$0xff]
        %v1693 = vadd.f32 %v1652, %v1653
        %1694 = vadd.xlane.f32.xlu0 %v1693
        %v1695 = vpop.xlane.xlu0 %1694
        %v1696 = vadd.f32 %v1654, %v1655
        %1697 = vadd.xlane.f32.xlu0 %v1696
        %v1698 = vpop.xlane.xlu0 %1697
        %v1699 = vadd.f32 %v1656, %v1657
        %1700 = vadd.xlane.f32.xlu0 %v1699
        %v1701 = vpop.xlane.xlu0 %1700
        %v1702 = vadd.f32 %v1658, %v1659
        %1703 = vadd.xlane.f32.xlu0 %v1702
        %v1704 = vpop.xlane.xlu0 %1703
        %v1705 = vadd.f32 %v1660, %v1661
        %1706 = vadd.xlane.f32.xlu0 %v1705
        %v1707 = vpop.xlane.xlu0 %1706
        %v1708 = vadd.f32 %v1662, %v1663
        %1709 = vadd.xlane.f32.xlu0 %v1708
        %v1710 = vpop.xlane.xlu0 %1709
        %v1711 = vadd.f32 %v1664, %v1665
        %1712 = vadd.xlane.f32.xlu0 %v1711
        %v1713 = vpop.xlane.xlu0 %1712
        %v1714 = vadd.f32 %v1666, %v1667
        %1715 = vadd.xlane.f32.xlu0 %v1714
        %v1716 = vpop.xlane.xlu0 %1715
        %v1717 = vmul.f32 %v1695, 0.00390625
        %v1718 = vmul.f32 %v1698, 0.00390625
        %v1719 = vmul.f32 %v1701, 0.00390625
        %v1720 = vmul.f32 %v1704, 0.00390625
        %v1721 = vmul.f32 %v1707, 0.00390625
        %v1722 = vmul.f32 %v1710, 0.00390625
        %v1723 = vmul.f32 %v1713, 0.00390625
        %v1724 = vmul.f32 %v1716, 0.00390625
        %v1725 = vmul.f32 %v1717, %v1668
        %v1726 = vmul.f32 %v1718, %v1669
        %v1727 = vmul.f32 %v1719, %v1670
        %v1728 = vmul.f32 %v1720, %v1671
        %v1729 = vmul.f32 %v1721, %v1672
        %v1730 = vmul.f32 %v1722, %v1673
        %v1731 = vmul.f32 %v1723, %v1674
        %v1732 = vmul.f32 %v1724, %v1675
        %vm1733 = vcmask 31744
        %v1734 = vsel %vm1733, %v1725, 0.0
        %v1735 = vsel %vm1733, %v1726, 0.0
        %v1736 = vadd.f32 %v1734, %v1735
        %v1737 = vsel %vm1733, %v1727, 0.0
        %v1738 = vadd.f32 %v1736, %v1737
        %v1739 = vsel %vm1733, %v1728, 0.0
        %v1740 = vadd.f32 %v1738, %v1739
        %v1741 = vsel %vm1733, %v1729, 0.0
        %v1742 = vadd.f32 %v1740, %v1741
        %v1743 = vsel %vm1733, %v1730, 0.0
        %v1744 = vadd.f32 %v1742, %v1743
        %v1745 = vsel %vm1733, %v1731, 0.0
        %v1746 = vadd.f32 %v1744, %v1745
        %v1747 = vsel %vm1733, %v1732, 0.0
        %v1748 = vadd.f32 %v1746, %v1747
        %v1749 = vrot.slane %v1748, 4
        %v1750 = vadd.f32 %v1748, %v1749
        %v1751 = vrot.slane %v1750, 2
        %v1752 = vadd.f32 %v1750, %v1751
        %v1753 = vrot.slane %v1752, 1
        %v1754 = vadd.f32 %v1752, %v1753
        %v1755 = vadd.f32 %v1754, %v1676
        %v1756 = vmul.f32 %v1755, 0.5
        %v1757 = vtanh.pop %v1756
        %v1758 = vmul.f32 %v1757, 0.5
        %v1759 = vadd.f32 %v1758, 0.5
        %v1760 = vmul.f32 %v1755, %v1759
        %v1761 = vlaneseq
        %v1762 = vshrl.u32 %v1761, 7
        %v1763 = vsub.s32 0, %v1762
        %v1764 = vrot.slane %v1760, %v1763
        %v1765 = vmul.f32 %v1677, %v1764
        %v1766 = vmul.f32 %v1678, %v1764
        %v1767 = vmul.f32 %v1679, %v1764
        %v1768 = vmul.f32 %v1680, %v1764
        %v1769 = vmul.f32 %v1681, %v1764
        %v1770 = vmul.f32 %v1682, %v1764
        %v1771 = vmul.f32 %v1683, %v1764
        %v1772 = vmul.f32 %v1684, %v1764
        %v1773 = vsel %vm1733, %v1765, 0.0
        %1774 = vadd.xlane.f32.xlu0 %v1773
        %v1775 = vpop.xlane.xlu0 %1774
        %v1776 = vsel %vm1733, %v1766, 0.0
        %1777 = vadd.xlane.f32.xlu0 %v1776
        %v1778 = vpop.xlane.xlu0 %1777
        %v1779 = vsel %vm1733, %v1767, 0.0
        %1780 = vadd.xlane.f32.xlu0 %v1779
        %v1781 = vpop.xlane.xlu0 %1780
        %v1782 = vsel %vm1733, %v1768, 0.0
        %1783 = vadd.xlane.f32.xlu0 %v1782
        %v1784 = vpop.xlane.xlu0 %1783
        %v1785 = vsel %vm1733, %v1769, 0.0
        %1786 = vadd.xlane.f32.xlu0 %v1785
        %v1787 = vpop.xlane.xlu0 %1786
        %v1788 = vsel %vm1733, %v1770, 0.0
        %1789 = vadd.xlane.f32.xlu0 %v1788
        %v1790 = vpop.xlane.xlu0 %1789
        %v1791 = vsel %vm1733, %v1771, 0.0
        %1792 = vadd.xlane.f32.xlu0 %v1791
        %v1793 = vpop.xlane.xlu0 %1792
        %v1794 = vsel %vm1733, %v1772, 0.0
        %1795 = vadd.xlane.f32.xlu0 %v1794
        %v1796 = vpop.xlane.xlu0 %1795
        %v1797 = vadd.f32 %v1775, %v1685
        %v1798 = vadd.f32 %v1778, %v1686
        %v1799 = vadd.f32 %v1781, %v1687
        %v1800 = vadd.f32 %v1784, %v1688
        %v1801 = vadd.f32 %v1787, %v1689
        %v1802 = vadd.f32 %v1790, %v1690
        %v1803 = vadd.f32 %v1793, %v1691
        %v1804 = vadd.f32 %v1796, %v1692
        %v1805 = vmul.f32 %v1797, 0.5
        %v1806 = vmul.f32 %v1798, 0.5
        %v1807 = vmul.f32 %v1799, 0.5
        %v1808 = vmul.f32 %v1800, 0.5
        %v1809 = vmul.f32 %v1801, 0.5
        %v1810 = vmul.f32 %v1802, 0.5
        %v1811 = vmul.f32 %v1803, 0.5
        %v1812 = vmul.f32 %v1804, 0.5
        %v1813 = vtanh.pop %v1805
        %v1814 = vtanh.pop %v1806
        %v1815 = vtanh.pop %v1807
        %v1816 = vtanh.pop %v1808
        %v1817 = vtanh.pop %v1809
        %v1818 = vtanh.pop %v1810
        %v1819 = vtanh.pop %v1811
        %v1820 = vtanh.pop %v1812
        %v1821 = vmul.f32 %v1813, 0.5
        %v1822 = vmul.f32 %v1814, 0.5
        %v1823 = vmul.f32 %v1815, 0.5
        %v1824 = vmul.f32 %v1816, 0.5
        %v1825 = vmul.f32 %v1817, 0.5
        %v1826 = vmul.f32 %v1818, 0.5
        %v1827 = vmul.f32 %v1819, 0.5
        %v1828 = vmul.f32 %v1820, 0.5
        %v1829 = vadd.f32 %v1821, 0.5
        %v1830 = vadd.f32 %v1822, 0.5
        %v1831 = vadd.f32 %v1823, 0.5
        %v1832 = vadd.f32 %v1824, 0.5
        %v1833 = vadd.f32 %v1825, 0.5
        %v1834 = vadd.f32 %v1826, 0.5
        %v1835 = vadd.f32 %v1827, 0.5
        %v1836 = vadd.f32 %v1828, 0.5
        %1838 = vset.pattern.permute.xlu0 0
        %1839 = vperm.xlu0 %1838, %v1829
        %v1840 = vpop.permute.xlu0 %1839
        %1843 = vset.pattern.permute.xlu0 0
        %1844 = vperm.xlu0 %1843, %v1830
        %v1845 = vpop.permute.xlu0 %1844
        %1848 = vset.pattern.permute.xlu0 0
        %1849 = vperm.xlu0 %1848, %v1831
        %v1850 = vpop.permute.xlu0 %1849
        %1853 = vset.pattern.permute.xlu0 0
        %1854 = vperm.xlu0 %1853, %v1832
        %v1855 = vpop.permute.xlu0 %1854
        %1858 = vset.pattern.permute.xlu0 0
        %1859 = vperm.xlu0 %1858, %v1833
        %v1860 = vpop.permute.xlu0 %1859
        %1863 = vset.pattern.permute.xlu0 0
        %1864 = vperm.xlu0 %1863, %v1834
        %v1865 = vpop.permute.xlu0 %1864
        %1868 = vset.pattern.permute.xlu0 0
        %1869 = vperm.xlu0 %1868, %v1835
        %v1870 = vpop.permute.xlu0 %1869
        %1873 = vset.pattern.permute.xlu0 0
        %1874 = vperm.xlu0 %1873, %v1836
        %v1875 = vpop.permute.xlu0 %1874
        %v1877 = vmul.f32 %v1652, %v1840
        %v1878 = vmul.f32 %v1653, %v1840
        %v1879 = vmul.f32 %v1654, %v1845
        %v1880 = vmul.f32 %v1655, %v1845
        %v1881 = vmul.f32 %v1656, %v1850
        %v1882 = vmul.f32 %v1657, %v1850
        %v1883 = vmul.f32 %v1658, %v1855
        %v1884 = vmul.f32 %v1659, %v1855
        %v1885 = vmul.f32 %v1660, %v1860
        %v1886 = vmul.f32 %v1661, %v1860
        %v1887 = vmul.f32 %v1662, %v1865
        %v1888 = vmul.f32 %v1663, %v1865
        %v1889 = vmul.f32 %v1664, %v1870
        %v1890 = vmul.f32 %v1665, %v1870
        %v1891 = vmul.f32 %v1666, %v1875
        %v1892 = vmul.f32 %v1667, %v1875
        %1893 = vst [vmem:[#allocation2] sm:$0xff] %v1877
        %1894 = vst [vmem:[#allocation2 + $0x8] sm:$0xff] %v1878
        %1895 = vst [vmem:[#allocation2 + $0x10] sm:$0xff] %v1879
        %1896 = vst [vmem:[#allocation2 + $0x18] sm:$0xff] %v1880
        %1897 = vst [vmem:[#allocation2 + $0x20] sm:$0xff] %v1881
        %1898 = vst [vmem:[#allocation2 + $0x28] sm:$0xff] %v1882
        %1899 = vst [vmem:[#allocation2 + $0x30] sm:$0xff] %v1883
        %1900 = vst [vmem:[#allocation2 + $0x38] sm:$0xff] %v1884
        %1901 = vst [vmem:[#allocation2 + $0x40] sm:$0xff] %v1885
        %1902 = vst [vmem:[#allocation2 + $0x48] sm:$0xff] %v1886
        %1903 = vst [vmem:[#allocation2 + $0x50] sm:$0xff] %v1887
        %1904 = vst [vmem:[#allocation2 + $0x58] sm:$0xff] %v1888
        %1905 = vst [vmem:[#allocation2 + $0x60] sm:$0xff] %v1889
        %1906 = vst [vmem:[#allocation2 + $0x68] sm:$0xff] %v1890
        %1907 = vst [vmem:[#allocation2 + $0x70] sm:$0xff] %v1891
        %1908 = vst [vmem:[#allocation2 + $0x78] sm:$0xff] %v1892
        %v1909 = vld [vmem:[%s9] sm:$0xff]
        %v1910 = vld [vmem:[%s9 + $0x8] sm:$0xff]
        %v1911 = vld [vmem:[#allocation2] sm:$0xff]
        %v1912 = vld [vmem:[#allocation2 + $0x8] sm:$0xff]
        %v1913 = vld [vmem:[#allocation2 + $0x10] sm:$0xff]
        %v1914 = vld [vmem:[#allocation2 + $0x18] sm:$0xff]
        %v1915 = vld [vmem:[#allocation2 + $0x20] sm:$0xff]
        %v1916 = vld [vmem:[#allocation2 + $0x28] sm:$0xff]
        %v1917 = vld [vmem:[#allocation2 + $0x30] sm:$0xff]
        %v1918 = vld [vmem:[#allocation2 + $0x38] sm:$0xff]
        %v1919 = vld [vmem:[#allocation2 + $0x40] sm:$0xff]
        %v1920 = vld [vmem:[#allocation2 + $0x48] sm:$0xff]
        %v1921 = vld [vmem:[#allocation2 + $0x50] sm:$0xff]
        %v1922 = vld [vmem:[#allocation2 + $0x58] sm:$0xff]
        %v1923 = vld [vmem:[#allocation2 + $0x60] sm:$0xff]
        %v1924 = vld [vmem:[#allocation2 + $0x68] sm:$0xff]
        %v1925 = vld [vmem:[#allocation2 + $0x70] sm:$0xff]
        %v1926 = vld [vmem:[#allocation2 + $0x78] sm:$0xff]
        %v1927 = vld [vmem:[%s10] sm:$0xff]
        %v1928 = vld [vmem:[%s10 + $0x8] sm:$0xff]
        %1930 = vset.pattern.permute.xlu0 0
        %1931 = vperm.xlu0 %1930, %v1927
        %v1932 = vpop.permute.xlu0 %1931
        %1935 = vset.pattern.permute.xlu0 0
        %1936 = vperm.xlu0 %1935, %v1928
        %v1937 = vpop.permute.xlu0 %1936
        %vm1939 = vcmask 523264
        %v1941 = vsel %vm1939, %v1909, 0
        %v1944 = vsel %vm1939, %v1910, 0
        %1946 = vmatprep.subr.mxu0 0.0
        %1947 = vmatpush1.msra.mxu0 0.0
        %1948 = vmatprep.subr.mxu0 0.0
        %1949 = vmatpush1.msra.mxu0 0.0
        %1950 = vmatprep.subr.mxu0 0.0
        %1951 = vmatpush1.msra.mxu0 0.0
        %1952 = vmatprep.subr.mxu0 0.0
        %1953 = vmatpush1.msra.mxu0 0.0
        %1954 = vmatprep.subr.mxu0 0.0
        %1955 = vmatpush1.msra.mxu0 0.0
        %1956 = vmatprep.subr.mxu0 0.0
        %1957 = vmatpush1.msra.mxu0 0.0
        %1958 = vmatprep.subr.mxu0 0.0
        %1959 = vmatpush1.msra.mxu0 0.0
        %1960 = vmatprep.subr.mxu0 0.0
        %1961 = vmatpush1.msra.mxu0 0.0
        %1962 = vmatprep.subr.mxu0 %v1926
        %1963 = vmatpush1.msra.mxu0 %v1925
        %1964 = vmatprep.subr.mxu0 %v1924
        %1965 = vmatpush1.msra.mxu0 %v1923
        %1966 = vmatprep.subr.mxu0 %v1922
        %1967 = vmatpush1.msra.mxu0 %v1921
        %1968 = vmatprep.subr.mxu0 %v1920
        %1969 = vmatpush1.msra.mxu0 %v1919
        %1970 = vmatprep.subr.mxu0 %v1918
        %1971 = vmatpush1.msra.mxu0 %v1917
        %1972 = vmatprep.subr.mxu0 %v1916
        %1973 = vmatpush1.msra.mxu0 %v1915
        %1974 = vmatprep.subr.mxu0 %v1914
        %1975 = vmatpush1.msra.mxu0 %v1913
        %1976 = vmatprep.subr.mxu0 %v1912
        %1977 = vmatpush1.msra.mxu0 %v1911
        %1978 = vmatprep.subr.mxu0 0.0
        %1979 = vmatpush2.msra.mxu0 0.0
        %1980 = vmatprep.subr.mxu0 0.0
        %1981 = vmatpush2.msra.mxu0 0.0
        %1982 = vmatprep.subr.mxu0 0.0
        %1983 = vmatpush2.msra.mxu0 0.0
        %1984 = vmatprep.subr.mxu0 0.0
        %1985 = vmatpush2.msra.mxu0 0.0
        %1986 = vmatprep.subr.mxu0 0.0
        %1987 = vmatpush2.msra.mxu0 0.0
        %1988 = vmatprep.subr.mxu0 0.0
        %1989 = vmatpush2.msra.mxu0 0.0
        %1990 = vmatprep.subr.mxu0 0.0
        %1991 = vmatpush2.msra.mxu0 0.0
        %1992 = vmatprep.subr.mxu0 0.0
        %1993 = vmatpush2.msra.mxu0 0.0
        %1994 = vmatprep.subr.mxu0 0.0
        %1995 = vmatpush2.msra.mxu0 0.0
        %1996 = vmatprep.subr.mxu0 0.0
        %1997 = vmatpush2.msra.mxu0 0.0
        %1998 = vmatprep.subr.mxu0 0.0
        %1999 = vmatpush2.msra.mxu0 0.0
        %2000 = vmatprep.subr.mxu0 0.0
        %2001 = vmatpush2.msra.mxu0 0.0
        %2002 = vmatprep.subr.mxu0 0.0
        %2003 = vmatpush2.msra.mxu0 0.0
        %2004 = vmatprep.subr.mxu0 0.0
        %2005 = vmatpush2.msra.mxu0 0.0
        %2006 = vmatprep.subr.mxu0 0.0
        %2007 = vmatpush2.msra.mxu0 0.0
        %2008 = vmatprep.subr.mxu0 0.0
        %2009 = vmatpush2.msra.mxu0 0.0
        %2010 = vmatprep.mubr.f32.mxu0 0.0
        %2011 = vmatmul.mubr.f32.gmra.mxu0 %v1941
        %v2012 = vpop.f32.mrf.mxu0
        %v2013 = vadd.f32 %v1932, %v2012
        %v2014 = vpop.f32.mrf.mxu0
        %v2015 = vadd.f32 %v1932, %v2014
        %2016 = vmatprep.mubr.f32.mxu0 0.0
        %2017 = vmatmul.mubr.f32.gmra.mxu0 %v1944
        %v2018 = vpop.f32.mrf.mxu0
        %v2019 = vadd.f32 %v1937, %v2018
        %v2020 = vpop.f32.mrf.mxu0
        %v2021 = vadd.f32 %v1937, %v2020
        %2022 = vdwg.mxu0
        %v2023 = vadd.f32 %v2013, %v428
        %v2024 = vadd.f32 %v2015, %v429
        %v2025 = vadd.f32 %v2019, %v430
        %v2026 = vadd.f32 %v2021, %v431
        %2027 = vst [vmem:[%s425] sm:$0xff] %v2023
        %2028 = vst [vmem:[%s425 + $0x8] sm:$0xff] %v2024
        %2029 = vst [vmem:[%s425 + $0x10] sm:$0xff] %v2025
        %2030 = vst [vmem:[%s425 + $0x18] sm:$0xff] %v2026
        %s2031 = sand.u32 %s270, 1
        %s2032 = scalar_lea.sflag [#allocation6], %s2031
        %s2033 = sand.u32 %s270, 1
        %s2034 = smul.addr %s2033, 32
        %s2035 = scalar_lea.vmem [#allocation7], %s2034
        // Predicated region
        $region92: #{tpu_custom_call.1} parent=82 // pred_check
          %p2036 = pneg %p280
        $region93: #{tpu_custom_call.1} parent=82 // pred_check_branch
          %2038 = sbr.rel (%p2036) target = $region95
        $region94: #{tpu_custom_call.1} parent=82 // pred_region
          %s2039 = smul.u32 2, %s26
          %s2041 = ssub.s32 512, 512
          %2042 = vsyncadd %s2032, %s2041
          %s2043 = smul.addr %s2039, 128
          %s2044 = scalar_lea.hbm %s11, %s2043
          %s2045 = sshll.u32 %s2035, 4
          %s2046 = int_to_ptr.vmem [resolvable:$true] %s2045
          %2051 = dma.vmem_to_hbm [thread:$0]  %s2046, 512, %s2044, %s2032, 256, 512, 16
        $region95: #{tpu_custom_call.1} parent=82 // pred_fallthru
          _
      $region83: #{tpu_custom_call.1} parent=5 // pred_fallthru
        _
      %p2052 = scmp.le.s32.totalorder 2, %s21
      // Predicated region
      $region96: #{tpu_custom_call.1} parent=5 // pred_check
        %p2053 = pneg %p2052
      $region97: #{tpu_custom_call.1} parent=5 // pred_check_branch
        %2055 = sbr.rel (%p2053) target = $region99
      $region98: #{tpu_custom_call.1} parent=5 // pred_region
        %s2056 = ssub.s32 %s21, 2
        // Predicated region
        $region100: #{tpu_custom_call.1} parent=98 // pred_check
          %p2057 = pneg %p286
        $region101: #{tpu_custom_call.1} parent=98 // pred_check_branch
          %2059 = sbr.rel (%p2057) target = $region103
        $region102: #{tpu_custom_call.1} parent=98 // pred_region
          %s2060 = sand.u32 %s271, 1
          %s2061 = scalar_lea.sflag [#allocation6], %s2060
          %s2062 = sand.u32 %s271, 1
          %s2063 = smul.addr %s2062, 32
          %s2064 = scalar_lea.vmem [#allocation7], %s2063
          %2065 = dma.done %s2061, 512
        $region103: #{tpu_custom_call.1} parent=98 // pred_fallthru
          _
      $region99: #{tpu_custom_call.1} parent=5 // pred_fallthru
        _
    $region6: #{tpu_custom_call.1} parent=1 // loop_footer
      %s25 = sadd.s32 1, %s21
    $region7: #{tpu_custom_call.1} parent=1 // loop_footer_branch
      %20 = sbr.rel target = $region3
    $region8: #{tpu_custom_call.1} parent=1 // loop_exit
      _
    %2066 = vsyncpa [#allocation5], 1
    %s2067 = scalar_lea.sflag [#allocation5], 1
    %2068 = vsyncpa %s2067, 1
    %2069 = vsyncpa [#allocation6], 1
    %s2070 = scalar_lea.sflag [#allocation6], 1
    %2071 = vsyncpa %s2070, 1

</llo_original>
